<compile_context>
chip_gen: v7x
topology: tpu7x:2x2x1
jax: 0.10.0
libtpu: 0.0.40
codegen_flags: <defaults>
</compile_context>

<pallas_src>
import math

import jax
import jax.numpy as jnp
from jax.experimental import pallas as pl
from jax.experimental.pallas import tpu as pltpu

SQRT_HALF = math.sqrt(0.5)
# bf16 operands at the MXU, f32 accumulation.  Set to jnp.float32 to recover exact-f32 math.
MATMUL_DTYPE = jnp.bfloat16


# ----------------------------- Pallas kernel --------------------------------

def decoder_kernel(wt_ref, gv_ref, attf_ref, mask_ref, paf_ref,
                   w_wt_ref, w_gv_ref, b_wg_ref,
                   w_c0_ref, b_c0_ref, w_c1_ref, b_c1_ref,
                   w_h_ref, b_h_ref, w_a_ref, b_a_ref,
                   out_ref):
    Bb, T, H = wt_ref.shape
    mm = w_wt_ref.dtype                      # matmul operand dtype (bf16 on MXU)

    # ---- wt_gv_embed: cat([wt, gv], -1) @ W(2H,H) + b  (split-matmul form of the concat)
    wt2d = wt_ref[...].reshape(Bb * T, H).astype(mm)
    x = jnp.dot(wt2d, w_wt_ref[...],
                preferred_element_type=jnp.float32).reshape(Bb, T, H)
    gv = gv_ref[...].reshape(Bb, H).astype(mm)                  # (Bb, H), identical across T
    gv_proj = jnp.dot(gv, w_gv_ref[...], preferred_element_type=jnp.float32)
    x = x + gv_proj[:, None, :] + b_wg_ref[...]                 # (Bb, T, H) f32

    # ---- stacked shifted (causal) conv + GLU layers, residual * sqrt(0.5) ----
    for w_ref, b_ref in ((w_c0_ref, b_c0_ref), (w_c1_ref, b_c1_ref)):
        K = w_ref.shape[0] // H
        # Left-pad once, gather the K taps as one (Bb*T, K*H) operand -> single MXU matmul
        # with a K-times deeper contraction (instead of K tiny matmuls + VPU adds).
        x_pad = jnp.concatenate([jnp.zeros((Bb, K - 1, H), x.dtype), x], axis=1)
        taps = jnp.concatenate([x_pad[:, j:j + T, :] for j in range(K)], axis=-1)
        acc = jnp.dot(taps.reshape(Bb * T, K * H).astype(mm), w_ref[...],
                      preferred_element_type=jnp.float32).reshape(Bb, T, 2 * H)
        acc = acc + b_ref[...]
        y = acc[..., :H] * jax.nn.sigmoid(acc[..., H:])          # GLU (f32)
        x = (y + x) * SQRT_HALF

    # ---- SoftAttention: additive attention with additive (-1e4) mask ----
    att_h = jnp.dot(x.reshape(Bb * T, H).astype(mm), w_h_ref[...],
                    preferred_element_type=jnp.float32) + b_h_ref[...]
    att_h = att_h.reshape(Bb, T, -1)                             # (Bb, T, E)
    # TODO(synk): for large M*E, compute the tanh/score in M-chunks to bound vreg live ranges.
    score = jnp.sum(jnp.tanh(paf_ref[...][:, None, :, :] + att_h[:, :, None, :])
                    * w_a_ref[...], axis=-1)                     # (Bb, T, M)
    score = score + b_a_ref[0, 0] + mask_ref[...]                # mask (Bb,1,M) bcast over T
    score = score - jnp.max(score, axis=-1, keepdims=True)
    ex = jnp.exp(score)
    alpha = ex * pl.reciprocal(jnp.sum(ex, axis=-1, keepdims=True), approx=True)

    # attention pooling as an MXU (batched) matmul: (Bb,T,M) x (Bb,M,H) -> (Bb,T,H)
    att_out = jnp.einsum('btm,bmh->bth', alpha, attf_ref[...],
                         preferred_element_type=jnp.float32)

    out_ref[...] = ((x + att_out) * SQRT_HALF).astype(out_ref.dtype)


# ------------------------------ wrapper --------------------------------------

def _choose_block_b(batch, seq_len, target_rows=256, max_rows=2048):
    """Largest divisor of `batch` giving roughly target_rows MXU rows per grid step."""
    best = 1
    for cand in range(1, batch + 1):
        if batch % cand != 0:
            continue
        if cand * seq_len <= max_rows:
            best = cand
        if cand * seq_len >= target_rows:
            break
    return best


def tdconved_decoder_forward(wt, global_feats, att_feats, ext_att_masks, p_att_feats,
                             params, kernel_sizes, block_b=None,
                             matmul_dtype=MATMUL_DTYPE):
    """wt: (B,T,H)  global_feats: (B,H)  att_feats: (B,M,H)  ext_att_masks: (B,M)
       p_att_feats: (B,M,E).  Attention tensors are NOT broadcast along T (done in-kernel)."""
    B, T, H = wt.shape
    M = att_feats.shape[1]
    E = p_att_feats.shape[-1]
    assert len(kernel_sizes) == 2            # matches default NUM_HIDDEN_LAYERS=2 config

    Bb = _choose_block_b(B, T) if block_b is None else block_b
    assert B % Bb == 0
    nb = B // Bb

    # Reshape the per-batch (T-invariant) inputs so the trailing two block dims always
    # equal the full array dims (keeps the (8,128) block rule satisfied for any Bb).
    gv_in = global_feats.reshape(B, 1, H)
    mask_in = ext_att_masks.reshape(B, 1, M)

    # Weight prep: weight_norm folded, split concat-weight, flatten conv taps, bf16 at MXU.
    w_wt = params["w_wg"][:H].astype(matmul_dtype)                         # (H, H)
    w_gv = params["w_wg"][H:].astype(matmul_dtype)                         # (H, H)
    w_c0 = params["w_c0"].reshape(kernel_sizes[0] * H, 2 * H).astype(matmul_dtype)
    w_c1 = params["w_c1"].reshape(kernel_sizes[1] * H, 2 * H).astype(matmul_dtype)
    w_h = params["w_h"].astype(matmul_dtype)                               # (H, E)

    def full(shape):                          # whole-array block, replicated across the grid
        zero = (0,) * len(shape)
        return pl.BlockSpec(shape, lambda i: zero)

    grid_spec = pltpu.PrefetchScalarGridSpec(
        num_scalar_prefetch=0,
        grid=(nb,),
        in_specs=[
            pl.BlockSpec((Bb, T, H), lambda i: (i, 0, 0)),   # wt
            pl.BlockSpec((Bb, 1, H), lambda i: (i, 0, 0)),   # global feats (no T broadcast)
            pl.BlockSpec((Bb, M, H), lambda i: (i, 0, 0)),   # att_feats   (no T broadcast)
            pl.BlockSpec((Bb, 1, M), lambda i: (i, 0, 0)),   # ext masks   (no T broadcast)
            pl.BlockSpec((Bb, M, E), lambda i: (i, 0, 0)),   # p_att_feats (no T broadcast)
            full((H, H)), full((H, H)), full((1, H)),        # wt_gv_embed (split) + bias
            full((kernel_sizes[0] * H, 2 * H)), full((1, 2 * H)),   # conv layer 0
            full((kernel_sizes[1] * H, 2 * H)), full((1, 2 * H)),   # conv layer 1
            full((H, E)), full((1, E)),                      # attention W_h, b_h
            full((1, E)),                                    # attention w_alpha
            pl.BlockSpec(memory_space=pltpu.MemorySpace.SMEM),  # b_alpha scalar -> SMEM
        ],
        out_specs=pl.BlockSpec((Bb, T, H), lambda i: (i, 0, 0)),
    )

    return pl.pallas_call(
        decoder_kernel,
        out_shape=jax.ShapeDtypeStruct((B, T, H), jnp.float32),
        grid_spec=grid_spec,
        compiler_params=pltpu.CompilerParams(dimension_semantics=("parallel",)),
    )(wt, gv_in, att_feats, mask_in, p_att_feats,
      w_wt, w_gv, params["b_wg"],
      w_c0, params["b_c0"], w_c1, params["b_c1"],
      w_h, params["b_h"], params["w_a"], params["b_a"])


# --------------------------- pure-JAX reference -------------------------------

def reference_forward(wt, gv, att_feats, ext_masks, p_att_feats, params, kernel_sizes,
                      matmul_dtype=MATMUL_DTYPE):
    """Same precision policy as the kernel: bf16 operands at matmuls, f32 accumulation."""
    B, T, H = wt.shape
    mm = matmul_dtype

    def mdot(a, w):
        return jnp.dot(a.astype(mm), w.astype(mm), preferred_element_type=jnp.float32)

    x = (mdot(wt, params["w_wg"][:H]) + mdot(gv, params["w_wg"][H:])[:, None, :]
         + params["b_wg"][0])
    for i, K in enumerate(kernel_sizes):
        w = params[f"w_c{i}"]
        b = params[f"b_c{i}"][0]
        acc = jnp.broadcast_to(b, (B, T, 2 * H)).astype(jnp.float32)
        for j in range(K):
            shift = (K - 1) - j
            xs = x if shift == 0 else jnp.concatenate(
                [jnp.zeros((B, shift, H), x.dtype), x[:, : T - shift]], axis=1)
            acc = acc + mdot(xs, w[j])
        y = acc[..., :H] * jax.nn.sigmoid(acc[..., H:])
        x = (y + x) * SQRT_HALF
    att_h = mdot(x, params["w_h"]) + params["b_h"][0]
    score = jnp.sum(jnp.tanh(p_att_feats[:, None] + att_h[:, :, None, :]) * params["w_a"][0],
                    axis=-1) + params["b_a"][0, 0] + ext_masks[:, None, :]
    alpha = jax.nn.softmax(score, axis=-1)
    att_out = jnp.einsum('btm,bmh->bth', alpha, att_feats)
    return (x + att_out) * SQRT_HALF


# ------------------------------- main -----------------------------------------

if __name__ == "__main__":
    B, T, M, H, E = 2, 8, 8, 32, 16          # batch, seq_len, num_frames, hidden, att_embed
    kernel_sizes = [3, 3]

    key = jax.random.PRNGKey(0)
    ks = jax.random.split(key, 14)
    f32 = jnp.float32

    # Decoder forward parameters (weight_norm folded into plain weights, eval mode).
    params = {
        "w_wg": 0.1 * jax.random.normal(ks[0], (2 * H, H), f32),
        "b_wg": 0.01 * jax.random.normal(ks[1], (1, H), f32),
        "w_c0": 0.1 * jax.random.normal(ks[2], (kernel_sizes[0], H, 2 * H), f32),
        "b_c0": 0.01 * jax.random.normal(ks[3], (1, 2 * H), f32),
        "w_c1": 0.1 * jax.random.normal(ks[4], (kernel_sizes[1], H, 2 * H), f32),
        "b_c1": 0.01 * jax.random.normal(ks[5], (1, 2 * H), f32),
        "w_h": 0.1 * jax.random.normal(ks[6], (H, E), f32),
        "b_h": 0.01 * jax.random.normal(ks[7], (1, E), f32),
        "w_a": 0.1 * jax.random.normal(ks[8], (1, E), f32),
        "b_a": jnp.zeros((1, 1), f32),
    }
    # Preprocess parameters (p_att_feats / gv_feat_embed linears) -- plain-JAX glue.
    w_p = 0.1 * jax.random.normal(ks[9], (H, E), f32)
    b_p = 0.01 * jax.random.normal(ks[10], (E,), f32)
    w_gv = 0.1 * jax.random.normal(ks[11], (H, H), f32)
    b_gv = 0.01 * jax.random.normal(ks[12], (H,), f32)

    # Raw inputs.
    att_feats_base = jax.random.normal(ks[13], (B, M, H), f32)          # (B, M, H)
    att_masks = jnp.array([[1.] * M, [1.] * (M - 2) + [0., 0.]], f32)   # (B, M)
    wt = jax.random.normal(jax.random.PRNGKey(1), (B, T, H), f32)       # token embeds

    # Preprocess glue (mirrors TDConvEDDecoder.preprocess, training branch, eval dropout).
    # NOTE: no broadcast along T here — the kernel broadcasts in-VMEM (T x less HBM traffic).
    p_att = att_feats_base @ w_p + b_p                                   # (B, M, E)
    gv = (jnp.sum(att_feats_base * att_masks[..., None], 1)
          / jnp.sum(att_masks[..., None], 1))                            # (B, H)
    gv = gv @ w_gv + b_gv
    ext_att_masks = (1.0 - att_masks) * -10000.0                         # (B, M)

    out = tdconved_decoder_forward(wt, gv, att_feats_base, ext_att_masks,
                                   p_att, params, kernel_sizes)
    out = jax.block_until_ready(out)

    ref = reference_forward(wt, gv, att_feats_base, ext_att_masks,
                            p_att, params, kernel_sizes)
    assert out.shape == (B, T, H)
    # Tolerance budget: bf16-at-MXU rounding (shared with the reference) + the approximate
    # EUP reciprocal in the softmax normalization (~2^-8 relative on alpha).
    if not jnp.allclose(out, ref, atol=2e-2, rtol=2e-2):
        raise AssertionError("Pallas kernel does not match reference")

    print("KERNEL_OK")
</pallas_src>

<mosaic_0001>
module attributes {stable_mosaic.version = 11 : i64} {
  func.func @decoder_kernel(%arg0: i32, %arg1: memref<2x8x32xf32, #tpu.memory_space<vmem>>, %arg2: memref<2x1x32xf32, #tpu.memory_space<vmem>>, %arg3: memref<2x8x32xf32, #tpu.memory_space<vmem>>, %arg4: memref<2x1x8xf32, #tpu.memory_space<vmem>>, %arg5: memref<2x8x16xf32, #tpu.memory_space<vmem>>, %arg6: memref<32x32xbf16, #tpu.memory_space<vmem>>, %arg7: memref<32x32xbf16, #tpu.memory_space<vmem>>, %arg8: memref<1x32xf32, #tpu.memory_space<vmem>>, %arg9: memref<96x64xbf16, #tpu.memory_space<vmem>>, %arg10: memref<1x64xf32, #tpu.memory_space<vmem>>, %arg11: memref<96x64xbf16, #tpu.memory_space<vmem>>, %arg12: memref<1x64xf32, #tpu.memory_space<vmem>>, %arg13: memref<32x16xbf16, #tpu.memory_space<vmem>>, %arg14: memref<1x16xf32, #tpu.memory_space<vmem>>, %arg15: memref<1x16xf32, #tpu.memory_space<vmem>>, %arg16: memref<1x1xf32, #tpu.memory_space<smem>>, %arg17: memref<2x8x32xf32, #tpu.memory_space<vmem>>) attributes {dimension_semantics = [#tpu.dimension_semantics<parallel>], iteration_bounds = array<i64: 1>, scalar_prefetch = 0 : i64, scratch_operands = 0 : i64, tpu.core_type = #tpu.core_type<tc>, window_params = [{transform_indices = @transform_0, window_bounds = array<i64: 2, 8, 32>}, {transform_indices = @transform_1, window_bounds = array<i64: 2, 1, 32>}, {transform_indices = @transform_2, window_bounds = array<i64: 2, 8, 32>}, {transform_indices = @transform_3, window_bounds = array<i64: 2, 1, 8>}, {transform_indices = @transform_4, window_bounds = array<i64: 2, 8, 16>}, {pipeline_mode = #tpu.pipeline_mode<synchronous>, transform_indices = @transform_5, window_bounds = array<i64: 32, 32>}, {pipeline_mode = #tpu.pipeline_mode<synchronous>, transform_indices = @transform_6, window_bounds = array<i64: 32, 32>}, {pipeline_mode = #tpu.pipeline_mode<synchronous>, transform_indices = @transform_7, window_bounds = array<i64: 1, 32>}, {pipeline_mode = #tpu.pipeline_mode<synchronous>, transform_indices = @transform_8, window_bounds = array<i64: 96, 64>}, {pipeline_mode = #tpu.pipeline_mode<synchronous>, transform_indices = @transform_9, window_bounds = array<i64: 1, 64>}, {pipeline_mode = #tpu.pipeline_mode<synchronous>, transform_indices = @transform_10, window_bounds = array<i64: 96, 64>}, {pipeline_mode = #tpu.pipeline_mode<synchronous>, transform_indices = @transform_11, window_bounds = array<i64: 1, 64>}, {pipeline_mode = #tpu.pipeline_mode<synchronous>, transform_indices = @transform_12, window_bounds = array<i64: 32, 16>}, {pipeline_mode = #tpu.pipeline_mode<synchronous>, transform_indices = @transform_13, window_bounds = array<i64: 1, 16>}, {pipeline_mode = #tpu.pipeline_mode<synchronous>, transform_indices = @transform_14, window_bounds = array<i64: 1, 16>}, {transform_indices = @transform_15, window_bounds = array<i64: 1, 1>}, {transform_indices = @transform_16, window_bounds = array<i64: 2, 8, 32>}]} {
    %c0 = arith.constant 0 : index
    %c0_0 = arith.constant 0 : index
    %c0_1 = arith.constant 0 : index
    %0 = vector.load %arg1[%c0, %c0_0, %c0_1] : memref<2x8x32xf32, #tpu.memory_space<vmem>>, vector<2x8x32xf32>
    %1 = vector.shape_cast %0 : vector<2x8x32xf32> to vector<16x32xf32>
    %2 = arith.truncf %1 : vector<16x32xf32> to vector<16x32xbf16>
    %c0_2 = arith.constant 0 : index
    %c0_3 = arith.constant 0 : index
    %3 = vector.load %arg6[%c0_2, %c0_3] : memref<32x32xbf16, #tpu.memory_space<vmem>>, vector<32x32xbf16>
    %cst = arith.constant dense<0.000000e+00> : vector<16x32xf32>
    %4 = tpu.matmul %2, %3, %cst {dimension_numbers = #tpu.dot_dimension_numbers<[1], [0], [0], [1], [0, 0, 1, 1], [], []>} : vector<16x32xbf16>, vector<32x32xbf16>, vector<16x32xf32> -> vector<16x32xf32>
    %5 = vector.shape_cast %4 : vector<16x32xf32> to vector<2x8x32xf32>
    %c0_4 = arith.constant 0 : index
    %c0_5 = arith.constant 0 : index
    %c0_6 = arith.constant 0 : index
    %6 = vector.load %arg2[%c0_4, %c0_5, %c0_6] : memref<2x1x32xf32, #tpu.memory_space<vmem>>, vector<2x1x32xf32>
    %7 = vector.shape_cast %6 : vector<2x1x32xf32> to vector<2x32xf32>
    %8 = arith.truncf %7 : vector<2x32xf32> to vector<2x32xbf16>
    %c0_7 = arith.constant 0 : index
    %c0_8 = arith.constant 0 : index
    %9 = vector.load %arg7[%c0_7, %c0_8] : memref<32x32xbf16, #tpu.memory_space<vmem>>, vector<32x32xbf16>
    %cst_9 = arith.constant dense<0.000000e+00> : vector<2x32xf32>
    %10 = tpu.matmul %8, %9, %cst_9 {dimension_numbers = #tpu.dot_dimension_numbers<[1], [0], [0], [1], [0, 0, 1, 1], [], []>} : vector<2x32xbf16>, vector<32x32xbf16>, vector<2x32xf32> -> vector<2x32xf32>
    %11 = vector.shape_cast %10 : vector<2x32xf32> to vector<2x1x32xf32>
    %12 = vector.broadcast %11 : vector<2x1x32xf32> to vector<2x8x32xf32>
    %13 = arith.addf %5, %12 : vector<2x8x32xf32>
    %c0_10 = arith.constant 0 : index
    %c0_11 = arith.constant 0 : index
    %14 = vector.load %arg8[%c0_10, %c0_11] : memref<1x32xf32, #tpu.memory_space<vmem>>, vector<1x32xf32>
    %15 = vector.shape_cast %14 : vector<1x32xf32> to vector<1x1x32xf32>
    %16 = vector.broadcast %15 : vector<1x1x32xf32> to vector<2x8x32xf32>
    %17 = arith.addf %13, %16 : vector<2x8x32xf32>
    %cst_12 = arith.constant 0.000000e+00 : f32
    %18 = vector.broadcast %cst_12 : f32 to vector<2x2x32xf32>
    %19 = tpu.concatenate %18, %17 in 1 : vector<2x2x32xf32>, vector<2x8x32xf32> -> vector<2x10x32xf32>
    %20 = vector.extract_strided_slice %19 {offsets = [0, 0, 0], sizes = [2, 8, 32], strides = [1, 1, 1]} : vector<2x10x32xf32> to vector<2x8x32xf32>
    %21 = vector.extract_strided_slice %19 {offsets = [0, 1, 0], sizes = [2, 8, 32], strides = [1, 1, 1]} : vector<2x10x32xf32> to vector<2x8x32xf32>
    %22 = vector.extract_strided_slice %19 {offsets = [0, 2, 0], sizes = [2, 8, 32], strides = [1, 1, 1]} : vector<2x10x32xf32> to vector<2x8x32xf32>
    %23 = tpu.concatenate %20, %21, %22 in 2 : vector<2x8x32xf32>, vector<2x8x32xf32>, vector<2x8x32xf32> -> vector<2x8x96xf32>
    %24 = vector.shape_cast %23 : vector<2x8x96xf32> to vector<16x96xf32>
    %25 = arith.truncf %24 : vector<16x96xf32> to vector<16x96xbf16>
    %c0_13 = arith.constant 0 : index
    %c0_14 = arith.constant 0 : index
    %26 = vector.load %arg9[%c0_13, %c0_14] : memref<96x64xbf16, #tpu.memory_space<vmem>>, vector<96x64xbf16>
    %cst_15 = arith.constant dense<0.000000e+00> : vector<16x64xf32>
    %27 = tpu.matmul %25, %26, %cst_15 {dimension_numbers = #tpu.dot_dimension_numbers<[1], [0], [0], [1], [0, 0, 1, 1], [], []>} : vector<16x96xbf16>, vector<96x64xbf16>, vector<16x64xf32> -> vector<16x64xf32>
    %28 = vector.shape_cast %27 : vector<16x64xf32> to vector<2x8x64xf32>
    %c0_16 = arith.constant 0 : index
    %c0_17 = arith.constant 0 : index
    %29 = vector.load %arg10[%c0_16, %c0_17] : memref<1x64xf32, #tpu.memory_space<vmem>>, vector<1x64xf32>
    %30 = vector.shape_cast %29 : vector<1x64xf32> to vector<1x1x64xf32>
    %31 = vector.broadcast %30 : vector<1x1x64xf32> to vector<2x8x64xf32>
    %32 = arith.addf %28, %31 : vector<2x8x64xf32>
    %33 = vector.extract_strided_slice %32 {offsets = [0, 0, 0], sizes = [2, 8, 32], strides = [1, 1, 1]} : vector<2x8x64xf32> to vector<2x8x32xf32>
    %34 = vector.extract_strided_slice %32 {offsets = [0, 0, 32], sizes = [2, 8, 32], strides = [1, 1, 1]} : vector<2x8x64xf32> to vector<2x8x32xf32>
    %35 = arith.negf %34 : vector<2x8x32xf32>
    %36 = math.exp %35 : vector<2x8x32xf32>
    %cst_18 = arith.constant 1.000000e+00 : f32
    %37 = vector.broadcast %cst_18 : f32 to vector<2x8x32xf32>
    %38 = arith.addf %37, %36 : vector<2x8x32xf32>
    %39 = arith.divf %37, %38 : vector<2x8x32xf32>
    %40 = arith.mulf %33, %39 : vector<2x8x32xf32>
    %41 = arith.addf %40, %17 : vector<2x8x32xf32>
    %cst_19 = arith.constant 0.707106769 : f32
    %42 = vector.broadcast %cst_19 : f32 to vector<2x8x32xf32>
    %43 = arith.mulf %41, %42 : vector<2x8x32xf32>
    %cst_20 = arith.constant 0.000000e+00 : f32
    %44 = vector.broadcast %cst_20 : f32 to vector<2x2x32xf32>
    %45 = tpu.concatenate %44, %43 in 1 : vector<2x2x32xf32>, vector<2x8x32xf32> -> vector<2x10x32xf32>
    %46 = vector.extract_strided_slice %45 {offsets = [0, 0, 0], sizes = [2, 8, 32], strides = [1, 1, 1]} : vector<2x10x32xf32> to vector<2x8x32xf32>
    %47 = vector.extract_strided_slice %45 {offsets = [0, 1, 0], sizes = [2, 8, 32], strides = [1, 1, 1]} : vector<2x10x32xf32> to vector<2x8x32xf32>
    %48 = vector.extract_strided_slice %45 {offsets = [0, 2, 0], sizes = [2, 8, 32], strides = [1, 1, 1]} : vector<2x10x32xf32> to vector<2x8x32xf32>
    %49 = tpu.concatenate %46, %47, %48 in 2 : vector<2x8x32xf32>, vector<2x8x32xf32>, vector<2x8x32xf32> -> vector<2x8x96xf32>
    %50 = vector.shape_cast %49 : vector<2x8x96xf32> to vector<16x96xf32>
    %51 = arith.truncf %50 : vector<16x96xf32> to vector<16x96xbf16>
    %c0_21 = arith.constant 0 : index
    %c0_22 = arith.constant 0 : index
    %52 = vector.load %arg11[%c0_21, %c0_22] : memref<96x64xbf16, #tpu.memory_space<vmem>>, vector<96x64xbf16>
    %cst_23 = arith.constant dense<0.000000e+00> : vector<16x64xf32>
    %53 = tpu.matmul %51, %52, %cst_23 {dimension_numbers = #tpu.dot_dimension_numbers<[1], [0], [0], [1], [0, 0, 1, 1], [], []>} : vector<16x96xbf16>, vector<96x64xbf16>, vector<16x64xf32> -> vector<16x64xf32>
    %54 = vector.shape_cast %53 : vector<16x64xf32> to vector<2x8x64xf32>
    %c0_24 = arith.constant 0 : index
    %c0_25 = arith.constant 0 : index
    %55 = vector.load %arg12[%c0_24, %c0_25] : memref<1x64xf32, #tpu.memory_space<vmem>>, vector<1x64xf32>
    %56 = vector.shape_cast %55 : vector<1x64xf32> to vector<1x1x64xf32>
    %57 = vector.broadcast %56 : vector<1x1x64xf32> to vector<2x8x64xf32>
    %58 = arith.addf %54, %57 : vector<2x8x64xf32>
    %59 = vector.extract_strided_slice %58 {offsets = [0, 0, 0], sizes = [2, 8, 32], strides = [1, 1, 1]} : vector<2x8x64xf32> to vector<2x8x32xf32>
    %60 = vector.extract_strided_slice %58 {offsets = [0, 0, 32], sizes = [2, 8, 32], strides = [1, 1, 1]} : vector<2x8x64xf32> to vector<2x8x32xf32>
    %61 = arith.negf %60 : vector<2x8x32xf32>
    %62 = math.exp %61 : vector<2x8x32xf32>
    %cst_26 = arith.constant 1.000000e+00 : f32
    %63 = vector.broadcast %cst_26 : f32 to vector<2x8x32xf32>
    %64 = arith.addf %63, %62 : vector<2x8x32xf32>
    %65 = arith.divf %63, %64 : vector<2x8x32xf32>
    %66 = arith.mulf %59, %65 : vector<2x8x32xf32>
    %67 = arith.addf %66, %43 : vector<2x8x32xf32>
    %cst_27 = arith.constant 0.707106769 : f32
    %68 = vector.broadcast %cst_27 : f32 to vector<2x8x32xf32>
    %69 = arith.mulf %67, %68 : vector<2x8x32xf32>
    %70 = vector.shape_cast %69 : vector<2x8x32xf32> to vector<16x32xf32>
    %71 = arith.truncf %70 : vector<16x32xf32> to vector<16x32xbf16>
    %c0_28 = arith.constant 0 : index
    %c0_29 = arith.constant 0 : index
    %72 = vector.load %arg13[%c0_28, %c0_29] : memref<32x16xbf16, #tpu.memory_space<vmem>>, vector<32x16xbf16>
    %cst_30 = arith.constant dense<0.000000e+00> : vector<16x16xf32>
    %73 = tpu.matmul %71, %72, %cst_30 {dimension_numbers = #tpu.dot_dimension_numbers<[1], [0], [0], [1], [0, 0, 1, 1], [], []>} : vector<16x32xbf16>, vector<32x16xbf16>, vector<16x16xf32> -> vector<16x16xf32>
    %c0_31 = arith.constant 0 : index
    %c0_32 = arith.constant 0 : index
    %74 = vector.load %arg14[%c0_31, %c0_32] : memref<1x16xf32, #tpu.memory_space<vmem>>, vector<1x16xf32>
    %75 = vector.broadcast %74 : vector<1x16xf32> to vector<16x16xf32>
    %76 = arith.addf %73, %75 : vector<16x16xf32>
    %77 = vector.shape_cast %76 : vector<16x16xf32> to vector<2x8x16xf32>
    %c0_33 = arith.constant 0 : index
    %c0_34 = arith.constant 0 : index
    %c0_35 = arith.constant 0 : index
    %78 = vector.load %arg5[%c0_33, %c0_34, %c0_35] : memref<2x8x16xf32, #tpu.memory_space<vmem>>, vector<2x8x16xf32>
    %79 = vector.shape_cast %78 : vector<2x8x16xf32> to vector<2x1x8x16xf32>
    %80 = vector.shape_cast %77 : vector<2x8x16xf32> to vector<2x8x1x16xf32>
    %81 = vector.broadcast %79 : vector<2x1x8x16xf32> to vector<2x8x8x16xf32>
    %82 = vector.broadcast %80 : vector<2x8x1x16xf32> to vector<2x8x8x16xf32>
    %83 = arith.addf %81, %82 : vector<2x8x8x16xf32>
    %84 = math.tanh %83 : vector<2x8x8x16xf32>
    %c0_36 = arith.constant 0 : index
    %c0_37 = arith.constant 0 : index
    %85 = vector.load %arg15[%c0_36, %c0_37] : memref<1x16xf32, #tpu.memory_space<vmem>>, vector<1x16xf32>
    %86 = vector.shape_cast %85 : vector<1x16xf32> to vector<1x1x1x16xf32>
    %87 = vector.broadcast %86 : vector<1x1x1x16xf32> to vector<2x8x8x16xf32>
    %88 = arith.mulf %84, %87 : vector<2x8x8x16xf32>
    %cst_38 = arith.constant dense<0.000000e+00> : vector<2x8x8xf32>
    %89 = vector.multi_reduction <add>, %88, %cst_38 [3] : vector<2x8x8x16xf32> to vector<2x8x8xf32>
    %c0_39 = arith.constant 0 : index
    %c0_40 = arith.constant 0 : index
    %90 = memref.load %arg16[%c0_39, %c0_40] : memref<1x1xf32, #tpu.memory_space<smem>>
    %91 = vector.broadcast %90 : f32 to vector<2x8x8xf32>
    %92 = arith.addf %89, %91 : vector<2x8x8xf32>
    %c0_41 = arith.constant 0 : index
    %c0_42 = arith.constant 0 : index
    %c0_43 = arith.constant 0 : index
    %93 = vector.load %arg4[%c0_41, %c0_42, %c0_43] : memref<2x1x8xf32, #tpu.memory_space<vmem>>, vector<2x1x8xf32>
    %94 = vector.broadcast %93 : vector<2x1x8xf32> to vector<2x8x8xf32>
    %95 = arith.addf %92, %94 : vector<2x8x8xf32>
    %cst_44 = arith.constant dense<0xFF800000> : vector<2x8xf32>
    %96 = vector.multi_reduction <maximumf>, %95, %cst_44 [2] : vector<2x8x8xf32> to vector<2x8xf32>
    %97 = vector.shape_cast %96 : vector<2x8xf32> to vector<2x8x1xf32>
    %98 = vector.broadcast %97 : vector<2x8x1xf32> to vector<2x8x8xf32>
    %99 = arith.subf %95, %98 : vector<2x8x8xf32>
    %100 = math.exp %99 : vector<2x8x8xf32>
    %cst_45 = arith.constant dense<0.000000e+00> : vector<2x8xf32>
    %101 = vector.multi_reduction <add>, %100, %cst_45 [2] : vector<2x8x8xf32> to vector<2x8xf32>
    %102 = vector.shape_cast %101 : vector<2x8xf32> to vector<2x8x1xf32>
    %103 = tpu.reciprocal %102 {approx = true} : vector<2x8x1xf32> -> vector<2x8x1xf32>
    %104 = vector.broadcast %103 : vector<2x8x1xf32> to vector<2x8x8xf32>
    %105 = arith.mulf %100, %104 : vector<2x8x8xf32>
    %c0_46 = arith.constant 0 : index
    %c0_47 = arith.constant 0 : index
    %c0_48 = arith.constant 0 : index
    %106 = vector.load %arg3[%c0_46, %c0_47, %c0_48] : memref<2x8x32xf32, #tpu.memory_space<vmem>>, vector<2x8x32xf32>
    "tpu.trace_start"() <{level = 10 : i32, message = "btm,bmh->bth"}> : () -> ()
    %cst_49 = arith.constant dense<0.000000e+00> : vector<2x8x32xf32>
    %107 = tpu.matmul %105, %106, %cst_49 {dimension_numbers = #tpu.dot_dimension_numbers<[2], [1], [1], [2], [0, 0, 0, 1, 1, 2], [0], [0]>} : vector<2x8x8xf32>, vector<2x8x32xf32>, vector<2x8x32xf32> -> vector<2x8x32xf32>
    "tpu.trace_stop"() : () -> ()
    %108 = arith.addf %69, %107 : vector<2x8x32xf32>
    %cst_50 = arith.constant 0.707106769 : f32
    %109 = vector.broadcast %cst_50 : f32 to vector<2x8x32xf32>
    %110 = arith.mulf %108, %109 : vector<2x8x32xf32>
    %c0_51 = arith.constant 0 : index
    %c0_52 = arith.constant 0 : index
    %c0_53 = arith.constant 0 : index
    %111 = vector.load %arg17[%c0_51, %c0_52, %c0_53] : memref<2x8x32xf32, #tpu.memory_space<vmem>>, vector<2x8x32xf32>
    tpu.vector_store %arg17[%c0_51, %c0_52, %c0_53], %110 {strides = array<i32>} : memref<2x8x32xf32, #tpu.memory_space<vmem>>, vector<2x8x32xf32>,
    return
  }
  func.func @transform_0(%arg0: i32) -> (i32, i32, i32) {
    %c0_i32 = arith.constant 0 : i32
    %c0_i32_0 = arith.constant 0 : i32
    %c0_i32_1 = arith.constant 0 : i32
    return %arg0, %c0_i32, %c0_i32_0 : i32, i32, i32
  }
  func.func @transform_1(%arg0: i32) -> (i32, i32, i32) {
    %c0_i32 = arith.constant 0 : i32
    %c0_i32_0 = arith.constant 0 : i32
    %c0_i32_1 = arith.constant 0 : i32
    return %arg0, %c0_i32, %c0_i32_0 : i32, i32, i32
  }
  func.func @transform_2(%arg0: i32) -> (i32, i32, i32) {
    %c0_i32 = arith.constant 0 : i32
    %c0_i32_0 = arith.constant 0 : i32
    %c0_i32_1 = arith.constant 0 : i32
    return %arg0, %c0_i32, %c0_i32_0 : i32, i32, i32
  }
  func.func @transform_3(%arg0: i32) -> (i32, i32, i32) {
    %c0_i32 = arith.constant 0 : i32
    %c0_i32_0 = arith.constant 0 : i32
    %c0_i32_1 = arith.constant 0 : i32
    return %arg0, %c0_i32, %c0_i32_0 : i32, i32, i32
  }
  func.func @transform_4(%arg0: i32) -> (i32, i32, i32) {
    %c0_i32 = arith.constant 0 : i32
    %c0_i32_0 = arith.constant 0 : i32
    %c0_i32_1 = arith.constant 0 : i32
    return %arg0, %c0_i32, %c0_i32_0 : i32, i32, i32
  }
  func.func @transform_5(%arg0: i32) -> (i32, i32) {
    %c0_i32 = arith.constant 0 : i32
    %c0_i32_0 = arith.constant 0 : i32
    %c0_i32_1 = arith.constant 0 : i32
    return %c0_i32, %c0_i32_0 : i32, i32
  }
  func.func @transform_6(%arg0: i32) -> (i32, i32) {
    %c0_i32 = arith.constant 0 : i32
    %c0_i32_0 = arith.constant 0 : i32
    %c0_i32_1 = arith.constant 0 : i32
    return %c0_i32, %c0_i32_0 : i32, i32
  }
  func.func @transform_7(%arg0: i32) -> (i32, i32) {
    %c0_i32 = arith.constant 0 : i32
    %c0_i32_0 = arith.constant 0 : i32
    %c0_i32_1 = arith.constant 0 : i32
    return %c0_i32, %c0_i32_0 : i32, i32
  }
  func.func @transform_8(%arg0: i32) -> (i32, i32) {
    %c0_i32 = arith.constant 0 : i32
    %c0_i32_0 = arith.constant 0 : i32
    %c0_i32_1 = arith.constant 0 : i32
    return %c0_i32, %c0_i32_0 : i32, i32
  }
  func.func @transform_9(%arg0: i32) -> (i32, i32) {
    %c0_i32 = arith.constant 0 : i32
    %c0_i32_0 = arith.constant 0 : i32
    %c0_i32_1 = arith.constant 0 : i32
    return %c0_i32, %c0_i32_0 : i32, i32
  }
  func.func @transform_10(%arg0: i32) -> (i32, i32) {
    %c0_i32 = arith.constant 0 : i32
    %c0_i32_0 = arith.constant 0 : i32
    %c0_i32_1 = arith.constant 0 : i32
    return %c0_i32, %c0_i32_0 : i32, i32
  }
  func.func @transform_11(%arg0: i32) -> (i32, i32) {
    %c0_i32 = arith.constant 0 : i32
    %c0_i32_0 = arith.constant 0 : i32
    %c0_i32_1 = arith.constant 0 : i32
    return %c0_i32, %c0_i32_0 : i32, i32
  }
  func.func @transform_12(%arg0: i32) -> (i32, i32) {
    %c0_i32 = arith.constant 0 : i32
    %c0_i32_0 = arith.constant 0 : i32
    %c0_i32_1 = arith.constant 0 : i32
    return %c0_i32, %c0_i32_0 : i32, i32
  }
  func.func @transform_13(%arg0: i32) -> (i32, i32) {
    %c0_i32 = arith.constant 0 : i32
    %c0_i32_0 = arith.constant 0 : i32
    %c0_i32_1 = arith.constant 0 : i32
    return %c0_i32, %c0_i32_0 : i32, i32
  }
  func.func @transform_14(%arg0: i32) -> (i32, i32) {
    %c0_i32 = arith.constant 0 : i32
    %c0_i32_0 = arith.constant 0 : i32
    %c0_i32_1 = arith.constant 0 : i32
    return %c0_i32, %c0_i32_0 : i32, i32
  }
  func.func @transform_15(%arg0: i32) -> (i32, i32) {
    %c0_i32 = arith.constant 0 : i32
    %c0_i32_0 = arith.constant 0 : i32
    %c0_i32_1 = arith.constant 0 : i32
    return %c0_i32, %c0_i32_0 : i32, i32
  }
  func.func @transform_16(%arg0: i32) -> (i32, i32, i32) {
    %c0_i32 = arith.constant 0 : i32
    %c0_i32_0 = arith.constant 0 : i32
    %c0_i32_1 = arith.constant 0 : i32
    return %arg0, %c0_i32, %c0_i32_0 : i32, i32, i32
  }
}

</mosaic_0001>

<llo_original>
// kernel: tpu_custom_call.1
$region0: #{tpu_custom_call.1}
  #allocation0 [shape = 'u32[]', space=smem, size = 0x4, offset = 0x4, fixed_abs, tag = 'smem constant byte address 0x4 - core index']
  #allocation1 [shape = 'u32[144,128]{1,0:T(1,128)}', space=vmem, size = 0x12000, scoped, tag = 'internal scratch']
  #allocation2 [shape = 'f32[1,1]{1,0:T(1,128)S(6)}', space=smem, size = 0x200, scoped, tag = 'scoped memory for tpu_custom_call.1']
  %s0 = inlined_call_operand.vmem [shape: f32[2,8,32], index: 0, kind: input, shape index: {}]
  %s1 = inlined_call_operand.vmem [shape: f32[2,1,32], index: 1, kind: input, shape index: {}]
  %s2 = inlined_call_operand.vmem [shape: f32[2,8,32], index: 2, kind: input, shape index: {}]
  %s3 = inlined_call_operand.vmem [shape: f32[2,1,8], index: 3, kind: input, shape index: {}]
  %s4 = inlined_call_operand.vmem [shape: f32[2,8,16], index: 4, kind: input, shape index: {}]
  %s5 = inlined_call_operand.vmem [shape: bf16[32,32], index: 5, kind: input, shape index: {}]
  %s6 = inlined_call_operand.vmem [shape: bf16[32,32], index: 6, kind: input, shape index: {}]
  %s7 = inlined_call_operand.vmem [shape: f32[1,32], index: 7, kind: input, shape index: {}]
  %s8 = inlined_call_operand.vmem [shape: bf16[96,64], index: 8, kind: input, shape index: {}]
  %s9 = inlined_call_operand.vmem [shape: f32[1,64], index: 9, kind: input, shape index: {}]
  %s10 = inlined_call_operand.vmem [shape: bf16[96,64], index: 10, kind: input, shape index: {}]
  %s11 = inlined_call_operand.vmem [shape: f32[1,64], index: 11, kind: input, shape index: {}]
  %s12 = inlined_call_operand.vmem [shape: bf16[32,16], index: 12, kind: input, shape index: {}]
  %s13 = inlined_call_operand.vmem [shape: f32[1,16], index: 13, kind: input, shape index: {}]
  %s14 = inlined_call_operand.vmem [shape: f32[1,16], index: 14, kind: input, shape index: {}]
  %s15 = inlined_call_operand.<no memory space> [shape: f32[1,1], index: 15, kind: input, shape index: {}]
  %s16 = inlined_call_operand.hbm [shape: f32[2,8,32], index: 16, kind: output, shape index: {}]
  %s17 = sld [smem:[#allocation0]]
  $region74: #{tpu_custom_call.1} parent=0
    _
  %s19 = ssub.s32 1, %s17
  %s20 = scalar_select 0, %s19, %s17
  %21 = sst [smem:[#allocation2]] %s15
  $region1: #{tpu_custom_call.1} parent=0
    #allocation3 [shape = 'u8[8192]{0}', space=vmem, size = 0x2000, scoped, tag = 'output window, operand 0, single buffered']
    #allocation4 [shape = 's32[1]{0}', space=sflag, size = 0x4, scoped, tag = 'scoped memory for tpu_custom_call.1']
    %22 = vsyncpa [#allocation4], 0
    // Predicated region
    $region2: #{tpu_custom_call.1} parent=1 // pred_check
      _
    $region3: #{tpu_custom_call.1} parent=1 // pred_check_branch
      %24 = sbr.rel (0) target = $region5
    $region4: #{tpu_custom_call.1} parent=1 // pred_region
      _
    $region5: #{tpu_custom_call.1} parent=1 // pred_fallthru
      _
    // Predicated region
    $region6: #{tpu_custom_call.1} parent=1 // pred_check
      _
    $region7: #{tpu_custom_call.1} parent=1 // pred_check_branch
      %26 = sbr.rel (0) target = $region9
    $region8: #{tpu_custom_call.1} parent=1 // pred_region
      _
    $region9: #{tpu_custom_call.1} parent=1 // pred_fallthru
      _
    // Predicated region
    $region10: #{tpu_custom_call.1} parent=1 // pred_check
      _
    $region11: #{tpu_custom_call.1} parent=1 // pred_check_branch
      %28 = sbr.rel (0) target = $region13
    $region12: #{tpu_custom_call.1} parent=1 // pred_region
      _
    $region13: #{tpu_custom_call.1} parent=1 // pred_fallthru
      _
    // Predicated region
    $region14: #{tpu_custom_call.1} parent=1 // pred_check
      _
    $region15: #{tpu_custom_call.1} parent=1 // pred_check_branch
      %30 = sbr.rel (0) target = $region17
    $region16: #{tpu_custom_call.1} parent=1 // pred_region
      _
    $region17: #{tpu_custom_call.1} parent=1 // pred_fallthru
      _
    // Predicated region
    $region18: #{tpu_custom_call.1} parent=1 // pred_check
      _
    $region19: #{tpu_custom_call.1} parent=1 // pred_check_branch
      %32 = sbr.rel (0) target = $region21
    $region20: #{tpu_custom_call.1} parent=1 // pred_region
      _
    $region21: #{tpu_custom_call.1} parent=1 // pred_fallthru
      _
    // Predicated region
    $region22: #{tpu_custom_call.1} parent=1 // pred_check
      _
    $region23: #{tpu_custom_call.1} parent=1 // pred_check_branch
      %34 = sbr.rel (0) target = $region25
    $region24: #{tpu_custom_call.1} parent=1 // pred_region
      _
    $region25: #{tpu_custom_call.1} parent=1 // pred_fallthru
      _
    // Predicated region
    $region26: #{tpu_custom_call.1} parent=1 // pred_check
      _
    $region27: #{tpu_custom_call.1} parent=1 // pred_check_branch
      %36 = sbr.rel (0) target = $region29
    $region28: #{tpu_custom_call.1} parent=1 // pred_region
      _
    $region29: #{tpu_custom_call.1} parent=1 // pred_fallthru
      _
    // Predicated region
    $region30: #{tpu_custom_call.1} parent=1 // pred_check
      _
    $region31: #{tpu_custom_call.1} parent=1 // pred_check_branch
      %38 = sbr.rel (0) target = $region33
    $region32: #{tpu_custom_call.1} parent=1 // pred_region
      _
    $region33: #{tpu_custom_call.1} parent=1 // pred_fallthru
      _
    // Predicated region
    $region34: #{tpu_custom_call.1} parent=1 // pred_check
      _
    $region35: #{tpu_custom_call.1} parent=1 // pred_check_branch
      %40 = sbr.rel (0) target = $region37
    $region36: #{tpu_custom_call.1} parent=1 // pred_region
      _
    $region37: #{tpu_custom_call.1} parent=1 // pred_fallthru
      _
    // Predicated region
    $region38: #{tpu_custom_call.1} parent=1 // pred_check
      _
    $region39: #{tpu_custom_call.1} parent=1 // pred_check_branch
      %42 = sbr.rel (0) target = $region41
    $region40: #{tpu_custom_call.1} parent=1 // pred_region
      _
    $region41: #{tpu_custom_call.1} parent=1 // pred_fallthru
      _
    // Predicated region
    $region42: #{tpu_custom_call.1} parent=1 // pred_check
      _
    $region43: #{tpu_custom_call.1} parent=1 // pred_check_branch
      %44 = sbr.rel (0) target = $region45
    $region44: #{tpu_custom_call.1} parent=1 // pred_region
      _
    $region45: #{tpu_custom_call.1} parent=1 // pred_fallthru
      _
    // Predicated region
    $region46: #{tpu_custom_call.1} parent=1 // pred_check
      _
    $region47: #{tpu_custom_call.1} parent=1 // pred_check_branch
      %46 = sbr.rel (0) target = $region49
    $region48: #{tpu_custom_call.1} parent=1 // pred_region
      _
    $region49: #{tpu_custom_call.1} parent=1 // pred_fallthru
      _
    // Predicated region
    $region50: #{tpu_custom_call.1} parent=1 // pred_check
      _
    $region51: #{tpu_custom_call.1} parent=1 // pred_check_branch
      %48 = sbr.rel (0) target = $region53
    $region52: #{tpu_custom_call.1} parent=1 // pred_region
      _
    $region53: #{tpu_custom_call.1} parent=1 // pred_fallthru
      _
    // Predicated region
    $region54: #{tpu_custom_call.1} parent=1 // pred_check
      _
    $region55: #{tpu_custom_call.1} parent=1 // pred_check_branch
      %50 = sbr.rel (0) target = $region57
    $region56: #{tpu_custom_call.1} parent=1 // pred_region
      _
    $region57: #{tpu_custom_call.1} parent=1 // pred_fallthru
      _
    // Predicated region
    $region58: #{tpu_custom_call.1} parent=1 // pred_check
      _
    $region59: #{tpu_custom_call.1} parent=1 // pred_check_branch
      %52 = sbr.rel (0) target = $region61
    $region60: #{tpu_custom_call.1} parent=1 // pred_region
      _
    $region61: #{tpu_custom_call.1} parent=1 // pred_fallthru
      _
    // Predicated region
    $region62: #{tpu_custom_call.1} parent=1 // pred_check
      _
    $region63: #{tpu_custom_call.1} parent=1 // pred_check_branch
      %54 = sbr.rel (0) target = $region65
    $region64: #{tpu_custom_call.1} parent=1 // pred_region
      _
    $region65: #{tpu_custom_call.1} parent=1 // pred_fallthru
      _
    %v56 = vld [vmem:[%s0] sm:$0xff]
    %v57 = vld [vmem:[%s0 + $0x8] sm:$0xff]
    %v58 = vpack.c.bf16 %v57, %v56
    %v59 = vld [vmem:[%s5] sm:$0xf]
    %v60 = vld [vmem:[%s5 + $0x4] sm:$0xf]
    %v61 = vld [vmem:[%s5 + $0x8] sm:$0xf]
    %v62 = vld [vmem:[%s5 + $0xc] sm:$0xf]
    %v67 = vunpack.c.l.b16 %v59
    %v68 = vunpack.c.l.b16 %v60
    %v69 = vunpack.c.l.b16 %v61
    %v70 = vunpack.c.l.b16 %v62
    %v71 = vpack.c.b16 %v68, %v67
    %v72 = vpack.c.b16 %v70, %v69
    %vm75 = vcmask 261120
    %v77 = vsel %vm75, %v58, 0
    %79 = vmatprep.subr.bf16.mxu0 0
    %80 = vmatpush1.bf16.msra.mxu0 %v71
    %81 = vmatprep.subr.bf16.mxu0 0
    %82 = vmatpush1.bf16.msra.mxu0 %v72
    %83 = vmatprep.subr.bf16.mxu0 0
    %84 = vmatpush1.bf16.msra.mxu0 0
    %85 = vmatprep.subr.bf16.mxu0 0
    %86 = vmatpush1.bf16.msra.mxu0 0
    %87 = vmatprep.subr.bf16.mxu0 0
    %88 = vmatpush1.bf16.msra.mxu0 0
    %89 = vmatprep.subr.bf16.mxu0 0
    %90 = vmatpush1.bf16.msra.mxu0 0
    %91 = vmatprep.subr.bf16.mxu0 0
    %92 = vmatpush1.bf16.msra.mxu0 0
    %93 = vmatprep.subr.bf16.mxu0 0
    %94 = vmatpush1.bf16.msra.mxu0 0
    %95 = vmatprep.subr.bf16.mxu0 0
    %96 = vmatpush1.bf16.msra.mxu0 0
    %97 = vmatprep.subr.bf16.mxu0 0
    %98 = vmatpush1.bf16.msra.mxu0 0
    %99 = vmatprep.subr.bf16.mxu0 0
    %100 = vmatpush1.bf16.msra.mxu0 0
    %101 = vmatprep.subr.bf16.mxu0 0
    %102 = vmatpush1.bf16.msra.mxu0 0
    %103 = vmatprep.subr.bf16.mxu0 0
    %104 = vmatpush1.bf16.msra.mxu0 0
    %105 = vmatprep.subr.bf16.mxu0 0
    %106 = vmatpush1.bf16.msra.mxu0 0
    %107 = vmatprep.subr.bf16.mxu0 0
    %108 = vmatpush1.bf16.msra.mxu0 0
    %109 = vmatprep.subr.bf16.mxu0 0
    %110 = vmatpush1.bf16.msra.mxu0 0
    %111 = vmatprep.mubr.bf16.mxu0 0
    %112 = vmatmul.mubr.bf16.gmra.mrb[0].mxu0 %v77
    %v113 = vpop.f32.mrb[0].mxu0
    %v114 = vadd.f32 0.0, %v113
    %v115 = vpop.f32.mrb[0].mxu0
    %v116 = vpop.f32.mrb[0].mxu0
    %v117 = vadd.f32 0.0, %v116
    %v118 = vpop.f32.mrb[0].mxu0
    %119 = vdwg.mxu0
    %v120 = vld [vmem:[%s1] sm:$0x1]
    %v121 = vld [vmem:[%s1 + $0x1] sm:$0x1]
    %v122 = vpack.c.bf16 %v120, %v120
    %v123 = vpack.c.bf16 %v121, %v121
    %v124 = vld [vmem:[%s6] sm:$0xf]
    %v125 = vld [vmem:[%s6 + $0x4] sm:$0xf]
    %v126 = vld [vmem:[%s6 + $0x8] sm:$0xf]
    %v127 = vld [vmem:[%s6 + $0xc] sm:$0xf]
    %v130 = vunpack.c.l.b16 %v122
    %v131 = vunpack.c.l.b16 %v123
    %v132 = vrot.slane %v131, 7
    %vm133 = vcmask 1041409
    %v134 = vsel %vm133, %v132, %v130
    %v135 = vpack.c.b16 %v134, %v134
    %v140 = vunpack.c.l.b16 %v124
    %v141 = vunpack.c.l.b16 %v125
    %v142 = vunpack.c.l.b16 %v126
    %v143 = vunpack.c.l.b16 %v127
    %v144 = vpack.c.b16 %v141, %v140
    %v145 = vpack.c.b16 %v143, %v142
    %v149 = vsel %vm75, %v135, 0
    %151 = vmatprep.subr.bf16.mxu0 0
    %152 = vmatpush1.bf16.msra.mxu0 %v144
    %153 = vmatprep.subr.bf16.mxu0 0
    %154 = vmatpush1.bf16.msra.mxu0 %v145
    %155 = vmatprep.subr.bf16.mxu0 0
    %156 = vmatpush1.bf16.msra.mxu0 0
    %157 = vmatprep.subr.bf16.mxu0 0
    %158 = vmatpush1.bf16.msra.mxu0 0
    %159 = vmatprep.subr.bf16.mxu0 0
    %160 = vmatpush1.bf16.msra.mxu0 0
    %161 = vmatprep.subr.bf16.mxu0 0
    %162 = vmatpush1.bf16.msra.mxu0 0
    %163 = vmatprep.subr.bf16.mxu0 0
    %164 = vmatpush1.bf16.msra.mxu0 0
    %165 = vmatprep.subr.bf16.mxu0 0
    %166 = vmatpush1.bf16.msra.mxu0 0
    %167 = vmatprep.subr.bf16.mxu0 0
    %168 = vmatpush1.bf16.msra.mxu0 0
    %169 = vmatprep.subr.bf16.mxu0 0
    %170 = vmatpush1.bf16.msra.mxu0 0
    %171 = vmatprep.subr.bf16.mxu0 0
    %172 = vmatpush1.bf16.msra.mxu0 0
    %173 = vmatprep.subr.bf16.mxu0 0
    %174 = vmatpush1.bf16.msra.mxu0 0
    %175 = vmatprep.subr.bf16.mxu0 0
    %176 = vmatpush1.bf16.msra.mxu0 0
    %177 = vmatprep.subr.bf16.mxu0 0
    %178 = vmatpush1.bf16.msra.mxu0 0
    %179 = vmatprep.subr.bf16.mxu0 0
    %180 = vmatpush1.bf16.msra.mxu0 0
    %181 = vmatprep.subr.bf16.mxu0 0
    %182 = vmatpush1.bf16.msra.mxu0 0
    %183 = vmatprep.mubr.bf16.mxu0 0
    %184 = vmatmul.mubr.bf16.gmra.mrb[0].mxu0 %v149
    %v185 = vpop.f32.mrb[0].mxu0
    %v186 = vadd.f32 0.0, %v185
    %v187 = vpop.f32.mrb[0].mxu0
    %v188 = vpop.f32.mrb[0].mxu0
    %v189 = vpop.f32.mrb[0].mxu0
    %190 = vdwg.mxu0
    %v193 = vunpack.c.l.s4 1966171168
    %v194 = vunpack.c.0.s8 %v193
    %v195 = vlaneseq
    %v196 = vshrl.u32 %v195, 7
    %v197 = vsub.s32 %v194, %v196
    %v198 = vrot.slane %v186, %v197
    %v199 = vcombine.high %v198, %v198
    %v201 = vunpack.c.l.s4 1966171168
    %v202 = vunpack.c.0.s8 %v201
    %v203 = vlaneseq
    %v204 = vshrl.u32 %v203, 7
    %v205 = vsub.s32 %v202, %v204
    %v206 = vrot.slane %v198, %v205
    %v208 = vunpack.c.l.s4 1966171168
    %v209 = vunpack.c.0.s8 %v208
    %v210 = vlaneseq
    %v211 = vshrl.u32 %v210, 7
    %v212 = vsub.s32 %v209, %v211
    %v213 = vrot.slane %v199, %v212
    %v214 = vlaneseq
    %v215 = vshrl.u32 %v214, 7
    %v216 = vsub.s32 0, %v215
    %v217 = vrot.slane %v206, %v216
    %v218 = vlaneseq
    %v219 = vshrl.u32 %v218, 7
    %v220 = vsub.s32 0, %v219
    %v221 = vrot.slane %v213, %v220
    %v224 = vadd.f32 %v114, %v217
    %v225 = vadd.f32 %v117, %v221
    %v226 = vld [vmem:[%s7] sm:$0x1]
    %v228 = vlaneseq
    %v229 = vshrl.u32 %v228, 7
    %v230 = vsub.s32 0, %v229
    %v231 = vrot.slane %v226, %v230
    %v233 = vadd.f32 %v224, %v231
    %v234 = vadd.f32 %v225, %v231
    %v237 = vrot.slane %v233, 6
    %v238 = vrot.slane %v234, 6
    %vm241 = vcmask 1041408
    %v242 = vsel %vm241, 0.0, %v237
    %v243 = vsel %vm241, 0.0, %v238
    %vm246 = vcmask 1046528
    %v247 = vrot.slane %v242, 1
    %v248 = vrot.slane %v237, 1
    %v249 = vsel %vm246, %v247, %v248
    %v250 = vrot.slane %v243, 1
    %v251 = vrot.slane %v238, 1
    %v252 = vsel %vm246, %v250, %v251
    %253 = vrot.lane.b32.xlu0 %v249, 32
    %v254 = vpop.permute.xlu0 %253
    %255 = vrot.lane.b32.xlu0 %v252, 32
    %v256 = vpop.permute.xlu0 %255
    %vm259 = vcmask 1045504
    %v260 = vrot.slane %v242, 2
    %v261 = vrot.slane %v237, 2
    %v262 = vsel %vm259, %v260, %v261
    %v263 = vrot.slane %v243, 2
    %v264 = vrot.slane %v238, 2
    %v265 = vsel %vm259, %v263, %v264
    %266 = vrot.lane.b32.xlu0 %v262, 64
    %v267 = vpop.permute.xlu0 %266
    %268 = vrot.lane.b32.xlu0 %v265, 64
    %v269 = vpop.permute.xlu0 %268
    %v272 = vsel %vm75, %v242, %v254
    %v273 = vsel %vm75, %v243, %v256
    %vm274 = vcmask 523264
    %v275 = vsel %vm274, %v272, %v267
    %v276 = vsel %vm274, %v273, %v269
    %v277 = vpack.c.bf16 %v276, %v275
    %v278 = vld [vmem:[%s8] sm:$0xf]
    %v279 = vld [vmem:[%s8 + $0x4] sm:$0xf]
    %v280 = vld [vmem:[%s8 + $0x8] sm:$0xf]
    %v281 = vld [vmem:[%s8 + $0xc] sm:$0xf]
    %v282 = vld [vmem:[%s8 + $0x10] sm:$0xf]
    %v283 = vld [vmem:[%s8 + $0x14] sm:$0xf]
    %v284 = vld [vmem:[%s8 + $0x18] sm:$0xf]
    %v285 = vld [vmem:[%s8 + $0x1c] sm:$0xf]
    %v286 = vld [vmem:[%s8 + $0x20] sm:$0xf]
    %v287 = vld [vmem:[%s8 + $0x24] sm:$0xf]
    %v288 = vld [vmem:[%s8 + $0x28] sm:$0xf]
    %v289 = vld [vmem:[%s8 + $0x2c] sm:$0xf]
    %v302 = vunpack.c.l.b16 %v278
    %v303 = vunpack.c.l.b16 %v279
    %v304 = vunpack.c.l.b16 %v280
    %v305 = vunpack.c.l.b16 %v281
    %v306 = vunpack.c.l.b16 %v282
    %v307 = vunpack.c.l.b16 %v283
    %v308 = vunpack.c.l.b16 %v284
    %v309 = vunpack.c.l.b16 %v285
    %v310 = vunpack.c.l.b16 %v286
    %v311 = vunpack.c.l.b16 %v287
    %v312 = vunpack.c.l.b16 %v288
    %v313 = vunpack.c.l.b16 %v289
    %v314 = vpack.c.b16 %v303, %v302
    %v315 = vpack.c.b16 %v305, %v304
    %v316 = vpack.c.b16 %v307, %v306
    %v317 = vpack.c.b16 %v309, %v308
    %v318 = vpack.c.b16 %v311, %v310
    %v319 = vpack.c.b16 %v313, %v312
    %vm326 = vcmask 785408
    %v328 = vsel %vm326, %v277, 0
    %330 = vmatprep.subr.bf16.mxu0 0
    %331 = vmatpush1.bf16.msra.mxu0 %v314
    %332 = vmatprep.subr.bf16.mxu0 0
    %333 = vmatpush1.bf16.msra.mxu0 %v315
    %334 = vmatprep.subr.bf16.mxu0 0
    %335 = vmatpush1.bf16.msra.mxu0 %v316
    %336 = vmatprep.subr.bf16.mxu0 0
    %337 = vmatpush1.bf16.msra.mxu0 %v317
    %338 = vmatprep.subr.bf16.mxu0 0
    %339 = vmatpush1.bf16.msra.mxu0 %v318
    %340 = vmatprep.subr.bf16.mxu0 0
    %341 = vmatpush1.bf16.msra.mxu0 %v319
    %342 = vmatprep.subr.bf16.mxu0 0
    %343 = vmatpush1.bf16.msra.mxu0 0
    %344 = vmatprep.subr.bf16.mxu0 0
    %345 = vmatpush1.bf16.msra.mxu0 0
    %346 = vmatprep.subr.bf16.mxu0 0
    %347 = vmatpush1.bf16.msra.mxu0 0
    %348 = vmatprep.subr.bf16.mxu0 0
    %349 = vmatpush1.bf16.msra.mxu0 0
    %350 = vmatprep.subr.bf16.mxu0 0
    %351 = vmatpush1.bf16.msra.mxu0 0
    %352 = vmatprep.subr.bf16.mxu0 0
    %353 = vmatpush1.bf16.msra.mxu0 0
    %354 = vmatprep.subr.bf16.mxu0 0
    %355 = vmatpush1.bf16.msra.mxu0 0
    %356 = vmatprep.subr.bf16.mxu0 0
    %357 = vmatpush1.bf16.msra.mxu0 0
    %358 = vmatprep.subr.bf16.mxu0 0
    %359 = vmatpush1.bf16.msra.mxu0 0
    %360 = vmatprep.subr.bf16.mxu0 0
    %361 = vmatpush1.bf16.msra.mxu0 0
    %362 = vmatprep.mubr.bf16.mxu0 0
    %363 = vmatmul.mubr.bf16.gmra.mrb[0].mxu0 %v328
    %v364 = vpop.f32.mrb[0].mxu0
    %v365 = vadd.f32 0.0, %v364
    %v366 = vpop.f32.mrb[0].mxu0
    %v367 = vpop.f32.mrb[0].mxu0
    %v368 = vadd.f32 0.0, %v367
    %v369 = vpop.f32.mrb[0].mxu0
    %370 = vdwg.mxu0
    %v371 = vld [vmem:[%s9] sm:$0x1]
    %v373 = vlaneseq
    %v374 = vshrl.u32 %v373, 7
    %v375 = vsub.s32 0, %v374
    %v376 = vrot.slane %v371, %v375
    %v378 = vadd.f32 %v365, %v376
    %v379 = vadd.f32 %v368, %v376
    %v380 = vxor.u32 %v378, 2147483648
    %v381 = vxor.u32 %v379, 2147483648
    %v382 = vmul.f32 %v380, 1.442695
    %v383 = vpow.pop %v382
    %v384 = vmul.f32 %v381, 1.442695
    %v385 = vpow.pop %v384
    %v386 = vadd.f32 %v383, 1.0
    %v387 = vadd.f32 %v385, 1.0
    %v388 = vrcp.pop %v386
    %v389 = vmul.f32 1.0, %v388
    %v390 = vrcp.pop %v387
    %v391 = vmul.f32 1.0, %v390
    %394 = vrot.lane.b32.xlu0 %v389, 96
    %v395 = vpop.permute.xlu0 %394
    %396 = vrot.lane.b32.xlu0 %v391, 96
    %v397 = vpop.permute.xlu0 %396
    %v400 = vmul.f32 %v378, %v395
    %v401 = vmul.f32 %v379, %v397
    %v402 = vadd.f32 %v400, %v233
    %v403 = vadd.f32 %v401, %v234
    %v404 = vmul.f32 %v402, 0.70710677
    %v405 = vmul.f32 %v403, 0.70710677
    %v408 = vrot.slane %v404, 6
    %v409 = vrot.slane %v405, 6
    %v412 = vsel %vm241, 0.0, %v408
    %v413 = vsel %vm241, 0.0, %v409
    %v416 = vrot.slane %v412, 1
    %v417 = vrot.slane %v408, 1
    %v418 = vsel %vm246, %v416, %v417
    %v419 = vrot.slane %v413, 1
    %v420 = vrot.slane %v409, 1
    %v421 = vsel %vm246, %v419, %v420
    %422 = vrot.lane.b32.xlu0 %v418, 32
    %v423 = vpop.permute.xlu0 %422
    %424 = vrot.lane.b32.xlu0 %v421, 32
    %v425 = vpop.permute.xlu0 %424
    %v428 = vrot.slane %v412, 2
    %v429 = vrot.slane %v408, 2
    %v430 = vsel %vm259, %v428, %v429
    %v431 = vrot.slane %v413, 2
    %v432 = vrot.slane %v409, 2
    %v433 = vsel %vm259, %v431, %v432
    %434 = vrot.lane.b32.xlu0 %v430, 64
    %v435 = vpop.permute.xlu0 %434
    %436 = vrot.lane.b32.xlu0 %v433, 64
    %v437 = vpop.permute.xlu0 %436
    %v440 = vsel %vm75, %v412, %v423
    %v441 = vsel %vm75, %v413, %v425
    %v442 = vsel %vm274, %v440, %v435
    %v443 = vsel %vm274, %v441, %v437
    %v444 = vpack.c.bf16 %v443, %v442
    %v445 = vld [vmem:[%s10] sm:$0xf]
    %v446 = vld [vmem:[%s10 + $0x4] sm:$0xf]
    %v447 = vld [vmem:[%s10 + $0x8] sm:$0xf]
    %v448 = vld [vmem:[%s10 + $0xc] sm:$0xf]
    %v449 = vld [vmem:[%s10 + $0x10] sm:$0xf]
    %v450 = vld [vmem:[%s10 + $0x14] sm:$0xf]
    %v451 = vld [vmem:[%s10 + $0x18] sm:$0xf]
    %v452 = vld [vmem:[%s10 + $0x1c] sm:$0xf]
    %v453 = vld [vmem:[%s10 + $0x20] sm:$0xf]
    %v454 = vld [vmem:[%s10 + $0x24] sm:$0xf]
    %v455 = vld [vmem:[%s10 + $0x28] sm:$0xf]
    %v456 = vld [vmem:[%s10 + $0x2c] sm:$0xf]
    %v469 = vunpack.c.l.b16 %v445
    %v470 = vunpack.c.l.b16 %v446
    %v471 = vunpack.c.l.b16 %v447
    %v472 = vunpack.c.l.b16 %v448
    %v473 = vunpack.c.l.b16 %v449
    %v474 = vunpack.c.l.b16 %v450
    %v475 = vunpack.c.l.b16 %v451
    %v476 = vunpack.c.l.b16 %v452
    %v477 = vunpack.c.l.b16 %v453
    %v478 = vunpack.c.l.b16 %v454
    %v479 = vunpack.c.l.b16 %v455
    %v480 = vunpack.c.l.b16 %v456
    %v481 = vpack.c.b16 %v470, %v469
    %v482 = vpack.c.b16 %v472, %v471
    %v483 = vpack.c.b16 %v474, %v473
    %v484 = vpack.c.b16 %v476, %v475
    %v485 = vpack.c.b16 %v478, %v477
    %v486 = vpack.c.b16 %v480, %v479
    %v494 = vsel %vm326, %v444, 0
    %496 = vmatprep.subr.bf16.mxu0 0
    %497 = vmatpush1.bf16.msra.mxu0 %v481
    %498 = vmatprep.subr.bf16.mxu0 0
    %499 = vmatpush1.bf16.msra.mxu0 %v482
    %500 = vmatprep.subr.bf16.mxu0 0
    %501 = vmatpush1.bf16.msra.mxu0 %v483
    %502 = vmatprep.subr.bf16.mxu0 0
    %503 = vmatpush1.bf16.msra.mxu0 %v484
    %504 = vmatprep.subr.bf16.mxu0 0
    %505 = vmatpush1.bf16.msra.mxu0 %v485
    %506 = vmatprep.subr.bf16.mxu0 0
    %507 = vmatpush1.bf16.msra.mxu0 %v486
    %508 = vmatprep.subr.bf16.mxu0 0
    %509 = vmatpush1.bf16.msra.mxu0 0
    %510 = vmatprep.subr.bf16.mxu0 0
    %511 = vmatpush1.bf16.msra.mxu0 0
    %512 = vmatprep.subr.bf16.mxu0 0
    %513 = vmatpush1.bf16.msra.mxu0 0
    %514 = vmatprep.subr.bf16.mxu0 0
    %515 = vmatpush1.bf16.msra.mxu0 0
    %516 = vmatprep.subr.bf16.mxu0 0
    %517 = vmatpush1.bf16.msra.mxu0 0
    %518 = vmatprep.subr.bf16.mxu0 0
    %519 = vmatpush1.bf16.msra.mxu0 0
    %520 = vmatprep.subr.bf16.mxu0 0
    %521 = vmatpush1.bf16.msra.mxu0 0
    %522 = vmatprep.subr.bf16.mxu0 0
    %523 = vmatpush1.bf16.msra.mxu0 0
    %524 = vmatprep.subr.bf16.mxu0 0
    %525 = vmatpush1.bf16.msra.mxu0 0
    %526 = vmatprep.subr.bf16.mxu0 0
    %527 = vmatpush1.bf16.msra.mxu0 0
    %528 = vmatprep.mubr.bf16.mxu0 0
    %529 = vmatmul.mubr.bf16.gmra.mrb[0].mxu0 %v494
    %v530 = vpop.f32.mrb[0].mxu0
    %v531 = vadd.f32 0.0, %v530
    %v532 = vpop.f32.mrb[0].mxu0
    %v533 = vpop.f32.mrb[0].mxu0
    %v534 = vadd.f32 0.0, %v533
    %v535 = vpop.f32.mrb[0].mxu0
    %536 = vdwg.mxu0
    %v537 = vld [vmem:[%s11] sm:$0x1]
    %v539 = vlaneseq
    %v540 = vshrl.u32 %v539, 7
    %v541 = vsub.s32 0, %v540
    %v542 = vrot.slane %v537, %v541
    %v544 = vadd.f32 %v531, %v542
    %v545 = vadd.f32 %v534, %v542
    %v546 = vxor.u32 %v544, 2147483648
    %v547 = vxor.u32 %v545, 2147483648
    %v548 = vmul.f32 %v546, 1.442695
    %v549 = vpow.pop %v548
    %v550 = vmul.f32 %v547, 1.442695
    %v551 = vpow.pop %v550
    %v552 = vadd.f32 %v549, 1.0
    %v553 = vadd.f32 %v551, 1.0
    %v554 = vrcp.pop %v552
    %v555 = vmul.f32 1.0, %v554
    %v556 = vrcp.pop %v553
    %v557 = vmul.f32 1.0, %v556
    %560 = vrot.lane.b32.xlu0 %v555, 96
    %v561 = vpop.permute.xlu0 %560
    %562 = vrot.lane.b32.xlu0 %v557, 96
    %v563 = vpop.permute.xlu0 %562
    %v566 = vmul.f32 %v544, %v561
    %v567 = vmul.f32 %v545, %v563
    %v568 = vadd.f32 %v566, %v404
    %v569 = vadd.f32 %v567, %v405
    %v570 = vmul.f32 %v568, 0.70710677
    %v571 = vmul.f32 %v569, 0.70710677
    %v572 = vpack.c.bf16 %v571, %v570
    %v573 = vld [vmem:[%s12] sm:$0xf]
    %v574 = vld [vmem:[%s12 + $0x4] sm:$0xf]
    %v575 = vld [vmem:[%s12 + $0x8] sm:$0xf]
    %v576 = vld [vmem:[%s12 + $0xc] sm:$0xf]
    %v577 = vld [vmem:[%s13] sm:$0x1]
    %v579 = vlaneseq
    %v580 = vshrl.u32 %v579, 7
    %v581 = vsub.s32 0, %v580
    %v582 = vrot.slane %v577, %v581
    %v588 = vunpack.c.l.b16 %v573
    %v589 = vunpack.c.l.b16 %v574
    %v590 = vunpack.c.l.b16 %v575
    %v591 = vunpack.c.l.b16 %v576
    %v592 = vpack.c.b16 %v589, %v588
    %v593 = vpack.c.b16 %v591, %v590
    %v597 = vsel %vm75, %v572, 0
    %599 = vmatprep.subr.bf16.mxu0 0
    %600 = vmatpush1.bf16.msra.mxu0 %v592
    %601 = vmatprep.subr.bf16.mxu0 0
    %602 = vmatpush1.bf16.msra.mxu0 %v593
    %603 = vmatprep.subr.bf16.mxu0 0
    %604 = vmatpush1.bf16.msra.mxu0 0
    %605 = vmatprep.subr.bf16.mxu0 0
    %606 = vmatpush1.bf16.msra.mxu0 0
    %607 = vmatprep.subr.bf16.mxu0 0
    %608 = vmatpush1.bf16.msra.mxu0 0
    %609 = vmatprep.subr.bf16.mxu0 0
    %610 = vmatpush1.bf16.msra.mxu0 0
    %611 = vmatprep.subr.bf16.mxu0 0
    %612 = vmatpush1.bf16.msra.mxu0 0
    %613 = vmatprep.subr.bf16.mxu0 0
    %614 = vmatpush1.bf16.msra.mxu0 0
    %615 = vmatprep.subr.bf16.mxu0 0
    %616 = vmatpush1.bf16.msra.mxu0 0
    %617 = vmatprep.subr.bf16.mxu0 0
    %618 = vmatpush1.bf16.msra.mxu0 0
    %619 = vmatprep.subr.bf16.mxu0 0
    %620 = vmatpush1.bf16.msra.mxu0 0
    %621 = vmatprep.subr.bf16.mxu0 0
    %622 = vmatpush1.bf16.msra.mxu0 0
    %623 = vmatprep.subr.bf16.mxu0 0
    %624 = vmatpush1.bf16.msra.mxu0 0
    %625 = vmatprep.subr.bf16.mxu0 0
    %626 = vmatpush1.bf16.msra.mxu0 0
    %627 = vmatprep.subr.bf16.mxu0 0
    %628 = vmatpush1.bf16.msra.mxu0 0
    %629 = vmatprep.subr.bf16.mxu0 0
    %630 = vmatpush1.bf16.msra.mxu0 0
    %631 = vmatprep.mubr.bf16.mxu0 0
    %632 = vmatmul.mubr.bf16.gmra.mrb[0].mxu0 %v597
    %v633 = vpop.f32.mrb[0].mxu0
    %v634 = vadd.f32 %v582, %v633
    %v635 = vpop.f32.mrb[0].mxu0
    %v636 = vpop.f32.mrb[0].mxu0
    %v637 = vadd.f32 %v582, %v636
    %v638 = vpop.f32.mrb[0].mxu0
    %639 = vdwg.mxu0
    %v640 = vld [vmem:[%s4] sm:$0xff]
    %v641 = vld [vmem:[%s4 + $0x8] sm:$0xff]
    %v644 = vcombine.high %v634, %v634
    %v646 = vunpack.c.l.s4 1966171168
    %v647 = vunpack.c.0.s8 %v646
    %v648 = vlaneseq
    %v649 = vshrl.u32 %v648, 7
    %v650 = vsub.s32 %v647, %v649
    %v651 = vrot.slane %v634, %v650
    %v653 = vunpack.c.l.s4 1966171168
    %v654 = vunpack.c.0.s8 %v653
    %v655 = vlaneseq
    %v656 = vshrl.u32 %v655, 7
    %v657 = vsub.s32 %v654, %v656
    %v658 = vrot.slane %v644, %v657
    %v659 = vcombine.high %v651, %v651
    %v660 = vcombine.high %v658, %v658
    %v662 = vunpack.c.l.s4 1966171168
    %v663 = vunpack.c.0.s8 %v662
    %v664 = vlaneseq
    %v665 = vshrl.u32 %v664, 7
    %v666 = vsub.s32 %v663, %v665
    %v667 = vrot.slane %v651, %v666
    %v669 = vunpack.c.l.s4 1966171168
    %v670 = vunpack.c.0.s8 %v669
    %v671 = vlaneseq
    %v672 = vshrl.u32 %v671, 7
    %v673 = vsub.s32 %v670, %v672
    %v674 = vrot.slane %v658, %v673
    %v676 = vunpack.c.l.s4 1966171168
    %v677 = vunpack.c.0.s8 %v676
    %v678 = vlaneseq
    %v679 = vshrl.u32 %v678, 7
    %v680 = vsub.s32 %v677, %v679
    %v681 = vrot.slane %v659, %v680
    %v683 = vunpack.c.l.s4 1966171168
    %v684 = vunpack.c.0.s8 %v683
    %v685 = vlaneseq
    %v686 = vshrl.u32 %v685, 7
    %v687 = vsub.s32 %v684, %v686
    %v688 = vrot.slane %v660, %v687
    %v689 = vcombine.high %v667, %v667
    %v690 = vcombine.high %v674, %v674
    %v691 = vcombine.high %v681, %v681
    %v692 = vcombine.high %v688, %v688
    %v693 = vcombine.high %v637, %v637
    %v695 = vunpack.c.l.s4 1966171168
    %v696 = vunpack.c.0.s8 %v695
    %v697 = vlaneseq
    %v698 = vshrl.u32 %v697, 7
    %v699 = vsub.s32 %v696, %v698
    %v700 = vrot.slane %v637, %v699
    %v702 = vunpack.c.l.s4 1966171168
    %v703 = vunpack.c.0.s8 %v702
    %v704 = vlaneseq
    %v705 = vshrl.u32 %v704, 7
    %v706 = vsub.s32 %v703, %v705
    %v707 = vrot.slane %v693, %v706
    %v708 = vcombine.high %v700, %v700
    %v709 = vcombine.high %v707, %v707
    %v711 = vunpack.c.l.s4 1966171168
    %v712 = vunpack.c.0.s8 %v711
    %v713 = vlaneseq
    %v714 = vshrl.u32 %v713, 7
    %v715 = vsub.s32 %v712, %v714
    %v716 = vrot.slane %v700, %v715
    %v718 = vunpack.c.l.s4 1966171168
    %v719 = vunpack.c.0.s8 %v718
    %v720 = vlaneseq
    %v721 = vshrl.u32 %v720, 7
    %v722 = vsub.s32 %v719, %v721
    %v723 = vrot.slane %v707, %v722
    %v725 = vunpack.c.l.s4 1966171168
    %v726 = vunpack.c.0.s8 %v725
    %v727 = vlaneseq
    %v728 = vshrl.u32 %v727, 7
    %v729 = vsub.s32 %v726, %v728
    %v730 = vrot.slane %v708, %v729
    %v732 = vunpack.c.l.s4 1966171168
    %v733 = vunpack.c.0.s8 %v732
    %v734 = vlaneseq
    %v735 = vshrl.u32 %v734, 7
    %v736 = vsub.s32 %v733, %v735
    %v737 = vrot.slane %v709, %v736
    %v738 = vcombine.high %v716, %v716
    %v739 = vcombine.high %v723, %v723
    %v740 = vcombine.high %v730, %v730
    %v741 = vcombine.high %v737, %v737
    %v742 = vlaneseq
    %v743 = vshrl.u32 %v742, 7
    %v744 = vsub.s32 0, %v743
    %v745 = vrot.slane %v667, %v744
    %v746 = vlaneseq
    %v747 = vshrl.u32 %v746, 7
    %v748 = vsub.s32 0, %v747
    %v749 = vrot.slane %v681, %v748
    %v750 = vlaneseq
    %v751 = vshrl.u32 %v750, 7
    %v752 = vsub.s32 0, %v751
    %v753 = vrot.slane %v689, %v752
    %v754 = vlaneseq
    %v755 = vshrl.u32 %v754, 7
    %v756 = vsub.s32 0, %v755
    %v757 = vrot.slane %v691, %v756
    %v758 = vlaneseq
    %v759 = vshrl.u32 %v758, 7
    %v760 = vsub.s32 0, %v759
    %v761 = vrot.slane %v674, %v760
    %v762 = vlaneseq
    %v763 = vshrl.u32 %v762, 7
    %v764 = vsub.s32 0, %v763
    %v765 = vrot.slane %v688, %v764
    %v766 = vlaneseq
    %v767 = vshrl.u32 %v766, 7
    %v768 = vsub.s32 0, %v767
    %v769 = vrot.slane %v690, %v768
    %v770 = vlaneseq
    %v771 = vshrl.u32 %v770, 7
    %v772 = vsub.s32 0, %v771
    %v773 = vrot.slane %v692, %v772
    %v774 = vlaneseq
    %v775 = vshrl.u32 %v774, 7
    %v776 = vsub.s32 0, %v775
    %v777 = vrot.slane %v716, %v776
    %v778 = vlaneseq
    %v779 = vshrl.u32 %v778, 7
    %v780 = vsub.s32 0, %v779
    %v781 = vrot.slane %v730, %v780
    %v782 = vlaneseq
    %v783 = vshrl.u32 %v782, 7
    %v784 = vsub.s32 0, %v783
    %v785 = vrot.slane %v738, %v784
    %v786 = vlaneseq
    %v787 = vshrl.u32 %v786, 7
    %v788 = vsub.s32 0, %v787
    %v789 = vrot.slane %v740, %v788
    %v790 = vlaneseq
    %v791 = vshrl.u32 %v790, 7
    %v792 = vsub.s32 0, %v791
    %v793 = vrot.slane %v723, %v792
    %v794 = vlaneseq
    %v795 = vshrl.u32 %v794, 7
    %v796 = vsub.s32 0, %v795
    %v797 = vrot.slane %v737, %v796
    %v798 = vlaneseq
    %v799 = vshrl.u32 %v798, 7
    %v800 = vsub.s32 0, %v799
    %v801 = vrot.slane %v739, %v800
    %v802 = vlaneseq
    %v803 = vshrl.u32 %v802, 7
    %v804 = vsub.s32 0, %v803
    %v805 = vrot.slane %v741, %v804
    %v822 = vadd.f32 %v640, %v745
    %v823 = vadd.f32 %v640, %v749
    %v824 = vadd.f32 %v640, %v753
    %v825 = vadd.f32 %v640, %v757
    %v826 = vadd.f32 %v640, %v761
    %v827 = vadd.f32 %v640, %v765
    %v828 = vadd.f32 %v640, %v769
    %v829 = vadd.f32 %v640, %v773
    %v830 = vadd.f32 %v641, %v777
    %v831 = vadd.f32 %v641, %v781
    %v832 = vadd.f32 %v641, %v785
    %v833 = vadd.f32 %v641, %v789
    %v834 = vadd.f32 %v641, %v793
    %v835 = vadd.f32 %v641, %v797
    %v836 = vadd.f32 %v641, %v801
    %v837 = vadd.f32 %v641, %v805
    %v838 = vtanh.pop %v822
    %v839 = vtanh.pop %v823
    %v840 = vtanh.pop %v824
    %v841 = vtanh.pop %v825
    %v842 = vtanh.pop %v826
    %v843 = vtanh.pop %v827
    %v844 = vtanh.pop %v828
    %v845 = vtanh.pop %v829
    %v846 = vtanh.pop %v830
    %v847 = vtanh.pop %v831
    %v848 = vtanh.pop %v832
    %v849 = vtanh.pop %v833
    %v850 = vtanh.pop %v834
    %v851 = vtanh.pop %v835
    %v852 = vtanh.pop %v836
    %v853 = vtanh.pop %v837
    %v854 = vld [vmem:[%s14] sm:$0x1]
    %v856 = vlaneseq
    %v857 = vshrl.u32 %v856, 7
    %v858 = vsub.s32 0, %v857
    %v859 = vrot.slane %v854, %v858
    %v861 = vmul.f32 %v838, %v859
    %v862 = vmul.f32 %v839, %v859
    %v863 = vmul.f32 %v840, %v859
    %v864 = vmul.f32 %v841, %v859
    %v865 = vmul.f32 %v842, %v859
    %v866 = vmul.f32 %v843, %v859
    %v867 = vmul.f32 %v844, %v859
    %v868 = vmul.f32 %v845, %v859
    %v869 = vmul.f32 %v846, %v859
    %v870 = vmul.f32 %v847, %v859
    %v871 = vmul.f32 %v848, %v859
    %v872 = vmul.f32 %v849, %v859
    %v873 = vmul.f32 %v850, %v859
    %v874 = vmul.f32 %v851, %v859
    %v875 = vmul.f32 %v852, %v859
    %v876 = vmul.f32 %v853, %v859
    %vm877 = vcmask 130048
    %v878 = vsel %vm877, %v861, 0.0
    %879 = vadd.xlane.f32.xlu0 %v878
    %v880 = vpop.xlane.xlu0 %879
    %v881 = vsel %vm877, %v862, 0.0
    %882 = vadd.xlane.f32.xlu0 %v881
    %v883 = vpop.xlane.xlu0 %882
    %v884 = vsel %vm877, %v863, 0.0
    %885 = vadd.xlane.f32.xlu0 %v884
    %v886 = vpop.xlane.xlu0 %885
    %v887 = vsel %vm877, %v864, 0.0
    %888 = vadd.xlane.f32.xlu0 %v887
    %v889 = vpop.xlane.xlu0 %888
    %v890 = vsel %vm877, %v865, 0.0
    %891 = vadd.xlane.f32.xlu0 %v890
    %v892 = vpop.xlane.xlu0 %891
    %v893 = vsel %vm877, %v866, 0.0
    %894 = vadd.xlane.f32.xlu0 %v893
    %v895 = vpop.xlane.xlu0 %894
    %v896 = vsel %vm877, %v867, 0.0
    %897 = vadd.xlane.f32.xlu0 %v896
    %v898 = vpop.xlane.xlu0 %897
    %v899 = vsel %vm877, %v868, 0.0
    %900 = vadd.xlane.f32.xlu0 %v899
    %v901 = vpop.xlane.xlu0 %900
    %v902 = vsel %vm877, %v869, 0.0
    %903 = vadd.xlane.f32.xlu0 %v902
    %v904 = vpop.xlane.xlu0 %903
    %v905 = vsel %vm877, %v870, 0.0
    %906 = vadd.xlane.f32.xlu0 %v905
    %v907 = vpop.xlane.xlu0 %906
    %v908 = vsel %vm877, %v871, 0.0
    %909 = vadd.xlane.f32.xlu0 %v908
    %v910 = vpop.xlane.xlu0 %909
    %v911 = vsel %vm877, %v872, 0.0
    %912 = vadd.xlane.f32.xlu0 %v911
    %v913 = vpop.xlane.xlu0 %912
    %v914 = vsel %vm877, %v873, 0.0
    %915 = vadd.xlane.f32.xlu0 %v914
    %v916 = vpop.xlane.xlu0 %915
    %v917 = vsel %vm877, %v874, 0.0
    %918 = vadd.xlane.f32.xlu0 %v917
    %v919 = vpop.xlane.xlu0 %918
    %v920 = vsel %vm877, %v875, 0.0
    %921 = vadd.xlane.f32.xlu0 %v920
    %v922 = vpop.xlane.xlu0 %921
    %v923 = vsel %vm877, %v876, 0.0
    %924 = vadd.xlane.f32.xlu0 %v923
    %v925 = vpop.xlane.xlu0 %924
    %s926 = sld [smem:[#allocation2]]
    %v927 = vstv %s926
    %v928 = vadd.f32 %v880, %v927
    %v929 = vadd.f32 %v883, %v927
    %v930 = vadd.f32 %v886, %v927
    %v931 = vadd.f32 %v889, %v927
    %v932 = vadd.f32 %v892, %v927
    %v933 = vadd.f32 %v895, %v927
    %v934 = vadd.f32 %v898, %v927
    %v935 = vadd.f32 %v901, %v927
    %v936 = vadd.f32 %v904, %v927
    %v937 = vadd.f32 %v907, %v927
    %v938 = vadd.f32 %v910, %v927
    %v939 = vadd.f32 %v913, %v927
    %v940 = vadd.f32 %v916, %v927
    %v941 = vadd.f32 %v919, %v927
    %v942 = vadd.f32 %v922, %v927
    %v943 = vadd.f32 %v925, %v927
    %v944 = vld [vmem:[%s3] sm:$0x1]
    %v945 = vld [vmem:[%s3 + $0x1] sm:$0x1]
    %v948 = vlaneseq
    %v949 = vshrl.u32 %v948, 7
    %v950 = vsub.s32 0, %v949
    %v951 = vrot.slane %v944, %v950
    %v952 = vlaneseq
    %v953 = vshrl.u32 %v952, 7
    %v954 = vsub.s32 0, %v953
    %v955 = vrot.slane %v945, %v954
    %957 = vbcast.lane.b32.xlu0 %v951, 256
    %v958 = vpop.permute.xlu0 %957
    %960 = vbcast.lane.b32.xlu0 %v955, 256
    %v961 = vpop.permute.xlu0 %960
    %v964 = vadd.f32 %v928, %v958
    %v965 = vadd.f32 %v929, %v958
    %v966 = vadd.f32 %v930, %v958
    %v967 = vadd.f32 %v931, %v958
    %v968 = vadd.f32 %v932, %v958
    %v969 = vadd.f32 %v933, %v958
    %v970 = vadd.f32 %v934, %v958
    %v971 = vadd.f32 %v935, %v958
    %v972 = vadd.f32 %v936, %v961
    %v973 = vadd.f32 %v937, %v961
    %v974 = vadd.f32 %v938, %v961
    %v975 = vadd.f32 %v939, %v961
    %v976 = vadd.f32 %v940, %v961
    %v977 = vadd.f32 %v941, %v961
    %v978 = vadd.f32 %v942, %v961
    %v979 = vadd.f32 %v943, %v961
    %996 = vset.pattern.permute.xlu0 0
    %997 = vperm.xlu0 %996, %v964
    %v998 = vpop.permute.xlu0 %997
    %999 = vset.pattern.permute.xlu0 0
    %1000 = vperm.xlu0 %999, %v965
    %v1001 = vpop.permute.xlu0 %1000
    %1002 = vset.pattern.permute.xlu0 0
    %1003 = vperm.xlu0 %1002, %v966
    %v1004 = vpop.permute.xlu0 %1003
    %1005 = vset.pattern.permute.xlu0 0
    %1006 = vperm.xlu0 %1005, %v967
    %v1007 = vpop.permute.xlu0 %1006
    %1008 = vset.pattern.permute.xlu0 0
    %1009 = vperm.xlu0 %1008, %v968
    %v1010 = vpop.permute.xlu0 %1009
    %1011 = vset.pattern.permute.xlu0 0
    %1012 = vperm.xlu0 %1011, %v969
    %v1013 = vpop.permute.xlu0 %1012
    %1014 = vset.pattern.permute.xlu0 0
    %1015 = vperm.xlu0 %1014, %v970
    %v1016 = vpop.permute.xlu0 %1015
    %1017 = vset.pattern.permute.xlu0 0
    %1018 = vperm.xlu0 %1017, %v971
    %v1019 = vpop.permute.xlu0 %1018
    %1020 = vset.pattern.permute.xlu0 0
    %1021 = vperm.xlu0 %1020, %v972
    %v1022 = vpop.permute.xlu0 %1021
    %1023 = vset.pattern.permute.xlu0 0
    %1024 = vperm.xlu0 %1023, %v973
    %v1025 = vpop.permute.xlu0 %1024
    %1026 = vset.pattern.permute.xlu0 0
    %1027 = vperm.xlu0 %1026, %v974
    %v1028 = vpop.permute.xlu0 %1027
    %1029 = vset.pattern.permute.xlu0 0
    %1030 = vperm.xlu0 %1029, %v975
    %v1031 = vpop.permute.xlu0 %1030
    %1032 = vset.pattern.permute.xlu0 0
    %1033 = vperm.xlu0 %1032, %v976
    %v1034 = vpop.permute.xlu0 %1033
    %1035 = vset.pattern.permute.xlu0 0
    %1036 = vperm.xlu0 %1035, %v977
    %v1037 = vpop.permute.xlu0 %1036
    %1038 = vset.pattern.permute.xlu0 0
    %1039 = vperm.xlu0 %1038, %v978
    %v1040 = vpop.permute.xlu0 %1039
    %1041 = vset.pattern.permute.xlu0 0
    %1042 = vperm.xlu0 %1041, %v979
    %v1043 = vpop.permute.xlu0 %1042
    %v1044 = vlaneseq
    %v1045 = vand.u32 %v1044, 127
    %v1046 = vlaneseq
    %v1047 = vshrl.u32 %v1046, 7
    %v1048 = vsub.s32 %v1045, %v1047
    %v1049 = vrot.slane %v998, %v1048
    %v1050 = vlaneseq
    %v1051 = vshrl.u32 %v1050, 7
    %v1052 = vsub.s32 %v1045, %v1051
    %v1053 = vrot.slane %v1001, %v1052
    %v1054 = vlaneseq
    %v1055 = vshrl.u32 %v1054, 7
    %v1056 = vsub.s32 %v1045, %v1055
    %v1057 = vrot.slane %v1004, %v1056
    %v1058 = vlaneseq
    %v1059 = vshrl.u32 %v1058, 7
    %v1060 = vsub.s32 %v1045, %v1059
    %v1061 = vrot.slane %v1007, %v1060
    %v1062 = vlaneseq
    %v1063 = vshrl.u32 %v1062, 7
    %v1064 = vsub.s32 %v1045, %v1063
    %v1065 = vrot.slane %v1010, %v1064
    %v1066 = vlaneseq
    %v1067 = vshrl.u32 %v1066, 7
    %v1068 = vsub.s32 %v1045, %v1067
    %v1069 = vrot.slane %v1013, %v1068
    %v1070 = vlaneseq
    %v1071 = vshrl.u32 %v1070, 7
    %v1072 = vsub.s32 %v1045, %v1071
    %v1073 = vrot.slane %v1016, %v1072
    %v1074 = vlaneseq
    %v1075 = vshrl.u32 %v1074, 7
    %v1076 = vsub.s32 %v1045, %v1075
    %v1077 = vrot.slane %v1019, %v1076
    %v1078 = vlaneseq
    %v1079 = vshrl.u32 %v1078, 7
    %v1080 = vsub.s32 %v1045, %v1079
    %v1081 = vrot.slane %v1022, %v1080
    %v1082 = vlaneseq
    %v1083 = vshrl.u32 %v1082, 7
    %v1084 = vsub.s32 %v1045, %v1083
    %v1085 = vrot.slane %v1025, %v1084
    %v1086 = vlaneseq
    %v1087 = vshrl.u32 %v1086, 7
    %v1088 = vsub.s32 %v1045, %v1087
    %v1089 = vrot.slane %v1028, %v1088
    %v1090 = vlaneseq
    %v1091 = vshrl.u32 %v1090, 7
    %v1092 = vsub.s32 %v1045, %v1091
    %v1093 = vrot.slane %v1031, %v1092
    %v1094 = vlaneseq
    %v1095 = vshrl.u32 %v1094, 7
    %v1096 = vsub.s32 %v1045, %v1095
    %v1097 = vrot.slane %v1034, %v1096
    %v1098 = vlaneseq
    %v1099 = vshrl.u32 %v1098, 7
    %v1100 = vsub.s32 %v1045, %v1099
    %v1101 = vrot.slane %v1037, %v1100
    %v1102 = vlaneseq
    %v1103 = vshrl.u32 %v1102, 7
    %v1104 = vsub.s32 %v1045, %v1103
    %v1105 = vrot.slane %v1040, %v1104
    %v1106 = vlaneseq
    %v1107 = vshrl.u32 %v1106, 7
    %v1108 = vsub.s32 %v1045, %v1107
    %v1109 = vrot.slane %v1043, %v1108
    %v1110 = vsel %vm133, %v1053, %v1049
    %vm1111 = vcmask 1042434
    %v1112 = vsel %vm1111, %v1057, %v1110
    %vm1113 = vcmask 1043459
    %v1114 = vsel %vm1113, %v1061, %v1112
    %vm1115 = vcmask 1044484
    %v1116 = vsel %vm1115, %v1065, %v1114
    %vm1117 = vcmask 1045509
    %v1118 = vsel %vm1117, %v1069, %v1116
    %vm1119 = vcmask 1046534
    %v1120 = vsel %vm1119, %v1073, %v1118
    %vm1121 = vcmask 1047559
    %v1122 = vsel %vm1121, %v1077, %v1120
    %v1123 = vsel %vm133, %v1085, %v1081
    %v1124 = vsel %vm1111, %v1089, %v1123
    %v1125 = vsel %vm1113, %v1093, %v1124
    %v1126 = vsel %vm1115, %v1097, %v1125
    %v1127 = vsel %vm1117, %v1101, %v1126
    %v1128 = vsel %vm1119, %v1105, %v1127
    %v1129 = vsel %vm1121, %v1109, %v1128
    %vm1132 = vcmask 64512
    %v1133 = vsel %vm1132, %v1122, -inf
    %1134 = vmax.xlane.f32.xlu0 %v1133
    %v1135 = vpop.xlane.xlu0 %1134
    %v1136 = vsel %vm1132, %v1129, -inf
    %1137 = vmax.xlane.f32.xlu0 %v1136
    %v1138 = vpop.xlane.xlu0 %1137
    %v1141 = vlaneseq
    %v1142 = vshrl.u32 %v1141, 7
    %v1143 = vsub.s32 0, %v1142
    %v1144 = vrot.slane %v1135, %v1143
    %v1145 = vlaneseq
    %v1146 = vshrl.u32 %v1145, 7
    %v1147 = vsub.s32 1, %v1146
    %v1148 = vrot.slane %v1135, %v1147
    %v1149 = vlaneseq
    %v1150 = vshrl.u32 %v1149, 7
    %v1151 = vsub.s32 2, %v1150
    %v1152 = vrot.slane %v1135, %v1151
    %v1153 = vlaneseq
    %v1154 = vshrl.u32 %v1153, 7
    %v1155 = vsub.s32 3, %v1154
    %v1156 = vrot.slane %v1135, %v1155
    %v1157 = vlaneseq
    %v1158 = vshrl.u32 %v1157, 7
    %v1159 = vsub.s32 4, %v1158
    %v1160 = vrot.slane %v1135, %v1159
    %v1161 = vlaneseq
    %v1162 = vshrl.u32 %v1161, 7
    %v1163 = vsub.s32 5, %v1162
    %v1164 = vrot.slane %v1135, %v1163
    %v1165 = vlaneseq
    %v1166 = vshrl.u32 %v1165, 7
    %v1167 = vsub.s32 6, %v1166
    %v1168 = vrot.slane %v1135, %v1167
    %v1169 = vlaneseq
    %v1170 = vshrl.u32 %v1169, 7
    %v1171 = vsub.s32 7, %v1170
    %v1172 = vrot.slane %v1135, %v1171
    %v1173 = vlaneseq
    %v1174 = vshrl.u32 %v1173, 7
    %v1175 = vsub.s32 0, %v1174
    %v1176 = vrot.slane %v1138, %v1175
    %v1177 = vlaneseq
    %v1178 = vshrl.u32 %v1177, 7
    %v1179 = vsub.s32 1, %v1178
    %v1180 = vrot.slane %v1138, %v1179
    %v1181 = vlaneseq
    %v1182 = vshrl.u32 %v1181, 7
    %v1183 = vsub.s32 2, %v1182
    %v1184 = vrot.slane %v1138, %v1183
    %v1185 = vlaneseq
    %v1186 = vshrl.u32 %v1185, 7
    %v1187 = vsub.s32 3, %v1186
    %v1188 = vrot.slane %v1138, %v1187
    %v1189 = vlaneseq
    %v1190 = vshrl.u32 %v1189, 7
    %v1191 = vsub.s32 4, %v1190
    %v1192 = vrot.slane %v1138, %v1191
    %v1193 = vlaneseq
    %v1194 = vshrl.u32 %v1193, 7
    %v1195 = vsub.s32 5, %v1194
    %v1196 = vrot.slane %v1138, %v1195
    %v1197 = vlaneseq
    %v1198 = vshrl.u32 %v1197, 7
    %v1199 = vsub.s32 6, %v1198
    %v1200 = vrot.slane %v1138, %v1199
    %v1201 = vlaneseq
    %v1202 = vshrl.u32 %v1201, 7
    %v1203 = vsub.s32 7, %v1202
    %v1204 = vrot.slane %v1138, %v1203
    %v1221 = vsub.f32 %v964, %v1144
    %v1222 = vsub.f32 %v965, %v1148
    %v1223 = vsub.f32 %v966, %v1152
    %v1224 = vsub.f32 %v967, %v1156
    %v1225 = vsub.f32 %v968, %v1160
    %v1226 = vsub.f32 %v969, %v1164
    %v1227 = vsub.f32 %v970, %v1168
    %v1228 = vsub.f32 %v971, %v1172
    %v1229 = vsub.f32 %v972, %v1176
    %v1230 = vsub.f32 %v973, %v1180
    %v1231 = vsub.f32 %v974, %v1184
    %v1232 = vsub.f32 %v975, %v1188
    %v1233 = vsub.f32 %v976, %v1192
    %v1234 = vsub.f32 %v977, %v1196
    %v1235 = vsub.f32 %v978, %v1200
    %v1236 = vsub.f32 %v979, %v1204
    %v1237 = vmul.f32 %v1221, 1.442695
    %v1238 = vpow.pop %v1237
    %v1239 = vmul.f32 %v1222, 1.442695
    %v1240 = vpow.pop %v1239
    %v1241 = vmul.f32 %v1223, 1.442695
    %v1242 = vpow.pop %v1241
    %v1243 = vmul.f32 %v1224, 1.442695
    %v1244 = vpow.pop %v1243
    %v1245 = vmul.f32 %v1225, 1.442695
    %v1246 = vpow.pop %v1245
    %v1247 = vmul.f32 %v1226, 1.442695
    %v1248 = vpow.pop %v1247
    %v1249 = vmul.f32 %v1227, 1.442695
    %v1250 = vpow.pop %v1249
    %v1251 = vmul.f32 %v1228, 1.442695
    %v1252 = vpow.pop %v1251
    %v1253 = vmul.f32 %v1229, 1.442695
    %v1254 = vpow.pop %v1253
    %v1255 = vmul.f32 %v1230, 1.442695
    %v1256 = vpow.pop %v1255
    %v1257 = vmul.f32 %v1231, 1.442695
    %v1258 = vpow.pop %v1257
    %v1259 = vmul.f32 %v1232, 1.442695
    %v1260 = vpow.pop %v1259
    %v1261 = vmul.f32 %v1233, 1.442695
    %v1262 = vpow.pop %v1261
    %v1263 = vmul.f32 %v1234, 1.442695
    %v1264 = vpow.pop %v1263
    %v1265 = vmul.f32 %v1235, 1.442695
    %v1266 = vpow.pop %v1265
    %v1267 = vmul.f32 %v1236, 1.442695
    %v1268 = vpow.pop %v1267
    %1285 = vset.pattern.permute.xlu0 0
    %1286 = vperm.xlu0 %1285, %v1238
    %v1287 = vpop.permute.xlu0 %1286
    %1288 = vset.pattern.permute.xlu0 0
    %1289 = vperm.xlu0 %1288, %v1240
    %v1290 = vpop.permute.xlu0 %1289
    %1291 = vset.pattern.permute.xlu0 0
    %1292 = vperm.xlu0 %1291, %v1242
    %v1293 = vpop.permute.xlu0 %1292
    %1294 = vset.pattern.permute.xlu0 0
    %1295 = vperm.xlu0 %1294, %v1244
    %v1296 = vpop.permute.xlu0 %1295
    %1297 = vset.pattern.permute.xlu0 0
    %1298 = vperm.xlu0 %1297, %v1246
    %v1299 = vpop.permute.xlu0 %1298
    %1300 = vset.pattern.permute.xlu0 0
    %1301 = vperm.xlu0 %1300, %v1248
    %v1302 = vpop.permute.xlu0 %1301
    %1303 = vset.pattern.permute.xlu0 0
    %1304 = vperm.xlu0 %1303, %v1250
    %v1305 = vpop.permute.xlu0 %1304
    %1306 = vset.pattern.permute.xlu0 0
    %1307 = vperm.xlu0 %1306, %v1252
    %v1308 = vpop.permute.xlu0 %1307
    %1309 = vset.pattern.permute.xlu0 0
    %1310 = vperm.xlu0 %1309, %v1254
    %v1311 = vpop.permute.xlu0 %1310
    %1312 = vset.pattern.permute.xlu0 0
    %1313 = vperm.xlu0 %1312, %v1256
    %v1314 = vpop.permute.xlu0 %1313
    %1315 = vset.pattern.permute.xlu0 0
    %1316 = vperm.xlu0 %1315, %v1258
    %v1317 = vpop.permute.xlu0 %1316
    %1318 = vset.pattern.permute.xlu0 0
    %1319 = vperm.xlu0 %1318, %v1260
    %v1320 = vpop.permute.xlu0 %1319
    %1321 = vset.pattern.permute.xlu0 0
    %1322 = vperm.xlu0 %1321, %v1262
    %v1323 = vpop.permute.xlu0 %1322
    %1324 = vset.pattern.permute.xlu0 0
    %1325 = vperm.xlu0 %1324, %v1264
    %v1326 = vpop.permute.xlu0 %1325
    %1327 = vset.pattern.permute.xlu0 0
    %1328 = vperm.xlu0 %1327, %v1266
    %v1329 = vpop.permute.xlu0 %1328
    %1330 = vset.pattern.permute.xlu0 0
    %1331 = vperm.xlu0 %1330, %v1268
    %v1332 = vpop.permute.xlu0 %1331
    %v1333 = vlaneseq
    %v1334 = vshrl.u32 %v1333, 7
    %v1335 = vsub.s32 %v1045, %v1334
    %v1336 = vrot.slane %v1287, %v1335
    %v1337 = vlaneseq
    %v1338 = vshrl.u32 %v1337, 7
    %v1339 = vsub.s32 %v1045, %v1338
    %v1340 = vrot.slane %v1290, %v1339
    %v1341 = vlaneseq
    %v1342 = vshrl.u32 %v1341, 7
    %v1343 = vsub.s32 %v1045, %v1342
    %v1344 = vrot.slane %v1293, %v1343
    %v1345 = vlaneseq
    %v1346 = vshrl.u32 %v1345, 7
    %v1347 = vsub.s32 %v1045, %v1346
    %v1348 = vrot.slane %v1296, %v1347
    %v1349 = vlaneseq
    %v1350 = vshrl.u32 %v1349, 7
    %v1351 = vsub.s32 %v1045, %v1350
    %v1352 = vrot.slane %v1299, %v1351
    %v1353 = vlaneseq
    %v1354 = vshrl.u32 %v1353, 7
    %v1355 = vsub.s32 %v1045, %v1354
    %v1356 = vrot.slane %v1302, %v1355
    %v1357 = vlaneseq
    %v1358 = vshrl.u32 %v1357, 7
    %v1359 = vsub.s32 %v1045, %v1358
    %v1360 = vrot.slane %v1305, %v1359
    %v1361 = vlaneseq
    %v1362 = vshrl.u32 %v1361, 7
    %v1363 = vsub.s32 %v1045, %v1362
    %v1364 = vrot.slane %v1308, %v1363
    %v1365 = vlaneseq
    %v1366 = vshrl.u32 %v1365, 7
    %v1367 = vsub.s32 %v1045, %v1366
    %v1368 = vrot.slane %v1311, %v1367
    %v1369 = vlaneseq
    %v1370 = vshrl.u32 %v1369, 7
    %v1371 = vsub.s32 %v1045, %v1370
    %v1372 = vrot.slane %v1314, %v1371
    %v1373 = vlaneseq
    %v1374 = vshrl.u32 %v1373, 7
    %v1375 = vsub.s32 %v1045, %v1374
    %v1376 = vrot.slane %v1317, %v1375
    %v1377 = vlaneseq
    %v1378 = vshrl.u32 %v1377, 7
    %v1379 = vsub.s32 %v1045, %v1378
    %v1380 = vrot.slane %v1320, %v1379
    %v1381 = vlaneseq
    %v1382 = vshrl.u32 %v1381, 7
    %v1383 = vsub.s32 %v1045, %v1382
    %v1384 = vrot.slane %v1323, %v1383
    %v1385 = vlaneseq
    %v1386 = vshrl.u32 %v1385, 7
    %v1387 = vsub.s32 %v1045, %v1386
    %v1388 = vrot.slane %v1326, %v1387
    %v1389 = vlaneseq
    %v1390 = vshrl.u32 %v1389, 7
    %v1391 = vsub.s32 %v1045, %v1390
    %v1392 = vrot.slane %v1329, %v1391
    %v1393 = vlaneseq
    %v1394 = vshrl.u32 %v1393, 7
    %v1395 = vsub.s32 %v1045, %v1394
    %v1396 = vrot.slane %v1332, %v1395
    %v1397 = vsel %vm133, %v1340, %v1336
    %v1398 = vsel %vm1111, %v1344, %v1397
    %v1399 = vsel %vm1113, %v1348, %v1398
    %v1400 = vsel %vm1115, %v1352, %v1399
    %v1401 = vsel %vm1117, %v1356, %v1400
    %v1402 = vsel %vm1119, %v1360, %v1401
    %v1403 = vsel %vm1121, %v1364, %v1402
    %v1404 = vsel %vm133, %v1372, %v1368
    %v1405 = vsel %vm1111, %v1376, %v1404
    %v1406 = vsel %vm1113, %v1380, %v1405
    %v1407 = vsel %vm1115, %v1384, %v1406
    %v1408 = vsel %vm1117, %v1388, %v1407
    %v1409 = vsel %vm1119, %v1392, %v1408
    %v1410 = vsel %vm1121, %v1396, %v1409
    %v1413 = vsel %vm1132, %v1403, 0.0
    %1414 = vadd.xlane.f32.xlu0 %v1413
    %v1415 = vpop.xlane.xlu0 %1414
    %v1416 = vsel %vm1132, %v1410, 0.0
    %1417 = vadd.xlane.f32.xlu0 %v1416
    %v1418 = vpop.xlane.xlu0 %1417
    %v1419 = vrcp.pop %v1415
    %v1420 = vrcp.pop %v1418
    %v1423 = vlaneseq
    %v1424 = vshrl.u32 %v1423, 7
    %v1425 = vsub.s32 0, %v1424
    %v1426 = vrot.slane %v1419, %v1425
    %v1427 = vlaneseq
    %v1428 = vshrl.u32 %v1427, 7
    %v1429 = vsub.s32 1, %v1428
    %v1430 = vrot.slane %v1419, %v1429
    %v1431 = vlaneseq
    %v1432 = vshrl.u32 %v1431, 7
    %v1433 = vsub.s32 2, %v1432
    %v1434 = vrot.slane %v1419, %v1433
    %v1435 = vlaneseq
    %v1436 = vshrl.u32 %v1435, 7
    %v1437 = vsub.s32 3, %v1436
    %v1438 = vrot.slane %v1419, %v1437
    %v1439 = vlaneseq
    %v1440 = vshrl.u32 %v1439, 7
    %v1441 = vsub.s32 4, %v1440
    %v1442 = vrot.slane %v1419, %v1441
    %v1443 = vlaneseq
    %v1444 = vshrl.u32 %v1443, 7
    %v1445 = vsub.s32 5, %v1444
    %v1446 = vrot.slane %v1419, %v1445
    %v1447 = vlaneseq
    %v1448 = vshrl.u32 %v1447, 7
    %v1449 = vsub.s32 6, %v1448
    %v1450 = vrot.slane %v1419, %v1449
    %v1451 = vlaneseq
    %v1452 = vshrl.u32 %v1451, 7
    %v1453 = vsub.s32 7, %v1452
    %v1454 = vrot.slane %v1419, %v1453
    %v1455 = vlaneseq
    %v1456 = vshrl.u32 %v1455, 7
    %v1457 = vsub.s32 0, %v1456
    %v1458 = vrot.slane %v1420, %v1457
    %v1459 = vlaneseq
    %v1460 = vshrl.u32 %v1459, 7
    %v1461 = vsub.s32 1, %v1460
    %v1462 = vrot.slane %v1420, %v1461
    %v1463 = vlaneseq
    %v1464 = vshrl.u32 %v1463, 7
    %v1465 = vsub.s32 2, %v1464
    %v1466 = vrot.slane %v1420, %v1465
    %v1467 = vlaneseq
    %v1468 = vshrl.u32 %v1467, 7
    %v1469 = vsub.s32 3, %v1468
    %v1470 = vrot.slane %v1420, %v1469
    %v1471 = vlaneseq
    %v1472 = vshrl.u32 %v1471, 7
    %v1473 = vsub.s32 4, %v1472
    %v1474 = vrot.slane %v1420, %v1473
    %v1475 = vlaneseq
    %v1476 = vshrl.u32 %v1475, 7
    %v1477 = vsub.s32 5, %v1476
    %v1478 = vrot.slane %v1420, %v1477
    %v1479 = vlaneseq
    %v1480 = vshrl.u32 %v1479, 7
    %v1481 = vsub.s32 6, %v1480
    %v1482 = vrot.slane %v1420, %v1481
    %v1483 = vlaneseq
    %v1484 = vshrl.u32 %v1483, 7
    %v1485 = vsub.s32 7, %v1484
    %v1486 = vrot.slane %v1420, %v1485
    %v1503 = vmul.f32 %v1238, %v1426
    %v1504 = vmul.f32 %v1240, %v1430
    %v1505 = vmul.f32 %v1242, %v1434
    %v1506 = vmul.f32 %v1244, %v1438
    %v1507 = vmul.f32 %v1246, %v1442
    %v1508 = vmul.f32 %v1248, %v1446
    %v1509 = vmul.f32 %v1250, %v1450
    %v1510 = vmul.f32 %v1252, %v1454
    %v1511 = vmul.f32 %v1254, %v1458
    %v1512 = vmul.f32 %v1256, %v1462
    %v1513 = vmul.f32 %v1258, %v1466
    %v1514 = vmul.f32 %v1260, %v1470
    %v1515 = vmul.f32 %v1262, %v1474
    %v1516 = vmul.f32 %v1264, %v1478
    %v1517 = vmul.f32 %v1266, %v1482
    %v1518 = vmul.f32 %v1268, %v1486
    %v1519 = vld [vmem:[%s2] sm:$0xff]
    %v1520 = vld [vmem:[%s2 + $0x8] sm:$0xff]
    %1529 = vset.pattern.permute.xlu0 0
    %1530 = vperm.xlu0 %1529, %v1503
    %v1531 = vpop.permute.xlu0 %1530
    %1532 = vset.pattern.permute.xlu0 0
    %1533 = vperm.xlu0 %1532, %v1504
    %v1534 = vpop.permute.xlu0 %1533
    %1535 = vset.pattern.permute.xlu0 0
    %1536 = vperm.xlu0 %1535, %v1505
    %v1537 = vpop.permute.xlu0 %1536
    %1538 = vset.pattern.permute.xlu0 0
    %1539 = vperm.xlu0 %1538, %v1506
    %v1540 = vpop.permute.xlu0 %1539
    %1541 = vset.pattern.permute.xlu0 0
    %1542 = vperm.xlu0 %1541, %v1507
    %v1543 = vpop.permute.xlu0 %1542
    %1544 = vset.pattern.permute.xlu0 0
    %1545 = vperm.xlu0 %1544, %v1508
    %v1546 = vpop.permute.xlu0 %1545
    %1547 = vset.pattern.permute.xlu0 0
    %1548 = vperm.xlu0 %1547, %v1509
    %v1549 = vpop.permute.xlu0 %1548
    %1550 = vset.pattern.permute.xlu0 0
    %1551 = vperm.xlu0 %1550, %v1510
    %v1552 = vpop.permute.xlu0 %1551
    %v1553 = vlaneseq
    %v1554 = vshrl.u32 %v1553, 7
    %v1555 = vsub.s32 %v1045, %v1554
    %v1556 = vrot.slane %v1531, %v1555
    %v1557 = vlaneseq
    %v1558 = vshrl.u32 %v1557, 7
    %v1559 = vsub.s32 %v1045, %v1558
    %v1560 = vrot.slane %v1534, %v1559
    %v1561 = vlaneseq
    %v1562 = vshrl.u32 %v1561, 7
    %v1563 = vsub.s32 %v1045, %v1562
    %v1564 = vrot.slane %v1537, %v1563
    %v1565 = vlaneseq
    %v1566 = vshrl.u32 %v1565, 7
    %v1567 = vsub.s32 %v1045, %v1566
    %v1568 = vrot.slane %v1540, %v1567
    %v1569 = vlaneseq
    %v1570 = vshrl.u32 %v1569, 7
    %v1571 = vsub.s32 %v1045, %v1570
    %v1572 = vrot.slane %v1543, %v1571
    %v1573 = vlaneseq
    %v1574 = vshrl.u32 %v1573, 7
    %v1575 = vsub.s32 %v1045, %v1574
    %v1576 = vrot.slane %v1546, %v1575
    %v1577 = vlaneseq
    %v1578 = vshrl.u32 %v1577, 7
    %v1579 = vsub.s32 %v1045, %v1578
    %v1580 = vrot.slane %v1549, %v1579
    %v1581 = vlaneseq
    %v1582 = vshrl.u32 %v1581, 7
    %v1583 = vsub.s32 %v1045, %v1582
    %v1584 = vrot.slane %v1552, %v1583
    %v1585 = vsel %vm133, %v1560, %v1556
    %v1586 = vsel %vm1111, %v1564, %v1585
    %v1587 = vsel %vm1113, %v1568, %v1586
    %v1588 = vsel %vm1115, %v1572, %v1587
    %v1589 = vsel %vm1117, %v1576, %v1588
    %v1590 = vsel %vm1119, %v1580, %v1589
    %v1591 = vsel %vm1121, %v1584, %v1590
    %v1592 = vsel %vm1132, %v1591, 0
    %1594 = vmatprep.subr.mxu0 0.0
    %1595 = vmatpush1.msra.mxu0 %v1519
    %1596 = vmatprep.subr.mxu0 0.0
    %1597 = vmatpush1.msra.mxu0 0.0
    %1598 = vmatprep.subr.mxu0 0.0
    %1599 = vmatpush1.msra.mxu0 0.0
    %1600 = vmatprep.subr.mxu0 0.0
    %1601 = vmatpush1.msra.mxu0 0.0
    %1602 = vmatprep.subr.mxu0 0.0
    %1603 = vmatpush1.msra.mxu0 0.0
    %1604 = vmatprep.subr.mxu0 0.0
    %1605 = vmatpush1.msra.mxu0 0.0
    %1606 = vmatprep.subr.mxu0 0.0
    %1607 = vmatpush1.msra.mxu0 0.0
    %1608 = vmatprep.subr.mxu0 0.0
    %1609 = vmatpush1.msra.mxu0 0.0
    %1610 = vmatprep.subr.mxu0 0.0
    %1611 = vmatpush1.msra.mxu0 0.0
    %1612 = vmatprep.subr.mxu0 0.0
    %1613 = vmatpush1.msra.mxu0 0.0
    %1614 = vmatprep.subr.mxu0 0.0
    %1615 = vmatpush1.msra.mxu0 0.0
    %1616 = vmatprep.subr.mxu0 0.0
    %1617 = vmatpush1.msra.mxu0 0.0
    %1618 = vmatprep.subr.mxu0 0.0
    %1619 = vmatpush1.msra.mxu0 0.0
    %1620 = vmatprep.subr.mxu0 0.0
    %1621 = vmatpush1.msra.mxu0 0.0
    %1622 = vmatprep.subr.mxu0 0.0
    %1623 = vmatpush1.msra.mxu0 0.0
    %1624 = vmatprep.subr.mxu0 0.0
    %1625 = vmatpush1.msra.mxu0 0.0
    %1626 = vmatprep.subr.mxu0 0.0
    %1627 = vmatpush1.msra.mxu0 0.0
    %1628 = vmatprep.subr.mxu0 0.0
    %1629 = vmatpush1.msra.mxu0 0.0
    %1630 = vmatprep.subr.mxu0 0.0
    %1631 = vmatpush1.msra.mxu0 0.0
    %1632 = vmatprep.subr.mxu0 0.0
    %1633 = vmatpush1.msra.mxu0 0.0
    %1634 = vmatprep.subr.mxu0 0.0
    %1635 = vmatpush1.msra.mxu0 0.0
    %1636 = vmatprep.subr.mxu0 0.0
    %1637 = vmatpush1.msra.mxu0 0.0
    %1638 = vmatprep.subr.mxu0 0.0
    %1639 = vmatpush1.msra.mxu0 0.0
    %1640 = vmatprep.subr.mxu0 0.0
    %1641 = vmatpush1.msra.mxu0 0.0
    %1642 = vmatprep.subr.mxu0 0.0
    %1643 = vmatpush1.msra.mxu0 0.0
    %1644 = vmatprep.subr.mxu0 0.0
    %1645 = vmatpush1.msra.mxu0 0.0
    %1646 = vmatprep.subr.mxu0 0.0
    %1647 = vmatpush1.msra.mxu0 0.0
    %1648 = vmatprep.subr.mxu0 0.0
    %1649 = vmatpush1.msra.mxu0 0.0
    %1650 = vmatprep.subr.mxu0 0.0
    %1651 = vmatpush1.msra.mxu0 0.0
    %1652 = vmatprep.subr.mxu0 0.0
    %1653 = vmatpush1.msra.mxu0 0.0
    %1654 = vmatprep.subr.mxu0 0.0
    %1655 = vmatpush1.msra.mxu0 0.0
    %1656 = vmatprep.subr.mxu0 0.0
    %1657 = vmatpush1.msra.mxu0 0.0
    %1658 = vmatprep.mubr.f32.mxu0 0.0
    %1659 = vmatmul.mubr.f32.gmra.mrb[0].mxu0 %v1592
    %v1660 = vpop.f32.mrb[0].mxu0
    %v1661 = vadd.f32 0.0, %v1660
    %v1662 = vpop.f32.mrb[0].mxu0
    %1663 = vdwg.mxu0
    %1672 = vset.pattern.permute.xlu0 0
    %1673 = vperm.xlu0 %1672, %v1511
    %v1674 = vpop.permute.xlu0 %1673
    %1675 = vset.pattern.permute.xlu0 0
    %1676 = vperm.xlu0 %1675, %v1512
    %v1677 = vpop.permute.xlu0 %1676
    %1678 = vset.pattern.permute.xlu0 0
    %1679 = vperm.xlu0 %1678, %v1513
    %v1680 = vpop.permute.xlu0 %1679
    %1681 = vset.pattern.permute.xlu0 0
    %1682 = vperm.xlu0 %1681, %v1514
    %v1683 = vpop.permute.xlu0 %1682
    %1684 = vset.pattern.permute.xlu0 0
    %1685 = vperm.xlu0 %1684, %v1515
    %v1686 = vpop.permute.xlu0 %1685
    %1687 = vset.pattern.permute.xlu0 0
    %1688 = vperm.xlu0 %1687, %v1516
    %v1689 = vpop.permute.xlu0 %1688
    %1690 = vset.pattern.permute.xlu0 0
    %1691 = vperm.xlu0 %1690, %v1517
    %v1692 = vpop.permute.xlu0 %1691
    %1693 = vset.pattern.permute.xlu0 0
    %1694 = vperm.xlu0 %1693, %v1518
    %v1695 = vpop.permute.xlu0 %1694
    %v1696 = vlaneseq
    %v1697 = vshrl.u32 %v1696, 7
    %v1698 = vsub.s32 %v1045, %v1697
    %v1699 = vrot.slane %v1674, %v1698
    %v1700 = vlaneseq
    %v1701 = vshrl.u32 %v1700, 7
    %v1702 = vsub.s32 %v1045, %v1701
    %v1703 = vrot.slane %v1677, %v1702
    %v1704 = vlaneseq
    %v1705 = vshrl.u32 %v1704, 7
    %v1706 = vsub.s32 %v1045, %v1705
    %v1707 = vrot.slane %v1680, %v1706
    %v1708 = vlaneseq
    %v1709 = vshrl.u32 %v1708, 7
    %v1710 = vsub.s32 %v1045, %v1709
    %v1711 = vrot.slane %v1683, %v1710
    %v1712 = vlaneseq
    %v1713 = vshrl.u32 %v1712, 7
    %v1714 = vsub.s32 %v1045, %v1713
    %v1715 = vrot.slane %v1686, %v1714
    %v1716 = vlaneseq
    %v1717 = vshrl.u32 %v1716, 7
    %v1718 = vsub.s32 %v1045, %v1717
    %v1719 = vrot.slane %v1689, %v1718
    %v1720 = vlaneseq
    %v1721 = vshrl.u32 %v1720, 7
    %v1722 = vsub.s32 %v1045, %v1721
    %v1723 = vrot.slane %v1692, %v1722
    %v1724 = vlaneseq
    %v1725 = vshrl.u32 %v1724, 7
    %v1726 = vsub.s32 %v1045, %v1725
    %v1727 = vrot.slane %v1695, %v1726
    %v1728 = vsel %vm133, %v1703, %v1699
    %v1729 = vsel %vm1111, %v1707, %v1728
    %v1730 = vsel %vm1113, %v1711, %v1729
    %v1731 = vsel %vm1115, %v1715, %v1730
    %v1732 = vsel %vm1117, %v1719, %v1731
    %v1733 = vsel %vm1119, %v1723, %v1732
    %v1734 = vsel %vm1121, %v1727, %v1733
    %v1735 = vsel %vm1132, %v1734, 0
    %1737 = vmatprep.subr.mxu0 0.0
    %1738 = vmatpush1.msra.mxu0 %v1520
    %1739 = vmatprep.subr.mxu0 0.0
    %1740 = vmatpush1.msra.mxu0 0.0
    %1741 = vmatprep.subr.mxu0 0.0
    %1742 = vmatpush1.msra.mxu0 0.0
    %1743 = vmatprep.subr.mxu0 0.0
    %1744 = vmatpush1.msra.mxu0 0.0
    %1745 = vmatprep.subr.mxu0 0.0
    %1746 = vmatpush1.msra.mxu0 0.0
    %1747 = vmatprep.subr.mxu0 0.0
    %1748 = vmatpush1.msra.mxu0 0.0
    %1749 = vmatprep.subr.mxu0 0.0
    %1750 = vmatpush1.msra.mxu0 0.0
    %1751 = vmatprep.subr.mxu0 0.0
    %1752 = vmatpush1.msra.mxu0 0.0
    %1753 = vmatprep.subr.mxu0 0.0
    %1754 = vmatpush1.msra.mxu0 0.0
    %1755 = vmatprep.subr.mxu0 0.0
    %1756 = vmatpush1.msra.mxu0 0.0
    %1757 = vmatprep.subr.mxu0 0.0
    %1758 = vmatpush1.msra.mxu0 0.0
    %1759 = vmatprep.subr.mxu0 0.0
    %1760 = vmatpush1.msra.mxu0 0.0
    %1761 = vmatprep.subr.mxu0 0.0
    %1762 = vmatpush1.msra.mxu0 0.0
    %1763 = vmatprep.subr.mxu0 0.0
    %1764 = vmatpush1.msra.mxu0 0.0
    %1765 = vmatprep.subr.mxu0 0.0
    %1766 = vmatpush1.msra.mxu0 0.0
    %1767 = vmatprep.subr.mxu0 0.0
    %1768 = vmatpush1.msra.mxu0 0.0
    %1769 = vmatprep.subr.mxu0 0.0
    %1770 = vmatpush1.msra.mxu0 0.0
    %1771 = vmatprep.subr.mxu0 0.0
    %1772 = vmatpush1.msra.mxu0 0.0
    %1773 = vmatprep.subr.mxu0 0.0
    %1774 = vmatpush1.msra.mxu0 0.0
    %1775 = vmatprep.subr.mxu0 0.0
    %1776 = vmatpush1.msra.mxu0 0.0
    %1777 = vmatprep.subr.mxu0 0.0
    %1778 = vmatpush1.msra.mxu0 0.0
    %1779 = vmatprep.subr.mxu0 0.0
    %1780 = vmatpush1.msra.mxu0 0.0
    %1781 = vmatprep.subr.mxu0 0.0
    %1782 = vmatpush1.msra.mxu0 0.0
    %1783 = vmatprep.subr.mxu0 0.0
    %1784 = vmatpush1.msra.mxu0 0.0
    %1785 = vmatprep.subr.mxu0 0.0
    %1786 = vmatpush1.msra.mxu0 0.0
    %1787 = vmatprep.subr.mxu0 0.0
    %1788 = vmatpush1.msra.mxu0 0.0
    %1789 = vmatprep.subr.mxu0 0.0
    %1790 = vmatpush1.msra.mxu0 0.0
    %1791 = vmatprep.subr.mxu0 0.0
    %1792 = vmatpush1.msra.mxu0 0.0
    %1793 = vmatprep.subr.mxu0 0.0
    %1794 = vmatpush1.msra.mxu0 0.0
    %1795 = vmatprep.subr.mxu0 0.0
    %1796 = vmatpush1.msra.mxu0 0.0
    %1797 = vmatprep.subr.mxu0 0.0
    %1798 = vmatpush1.msra.mxu0 0.0
    %1799 = vmatprep.subr.mxu0 0.0
    %1800 = vmatpush1.msra.mxu0 0.0
    %1801 = vmatprep.mubr.f32.mxu0 0.0
    %1802 = vmatmul.mubr.f32.gmra.mrb[0].mxu0 %v1735
    %v1803 = vpop.f32.mrb[0].mxu0
    %v1804 = vadd.f32 0.0, %v1803
    %v1805 = vpop.f32.mrb[0].mxu0
    %1806 = vdwg.mxu0
    %v1807 = vadd.f32 %v570, %v1661
    %v1808 = vadd.f32 %v571, %v1804
    %v1809 = vmul.f32 %v1807, 0.70710677
    %v1810 = vmul.f32 %v1808, 0.70710677
    %1811 = vst.msk [vmem:[#allocation3] sm:$0xff] %vm75, %v1809
    %1812 = vst.msk [vmem:[#allocation3 + $0x8] sm:$0xff] %vm75, %v1810
    // Predicated region
    $region66: #{tpu_custom_call.1} parent=1 // pred_check
      _
    $region67: #{tpu_custom_call.1} parent=1 // pred_check_branch
      %1814 = sbr.rel (0) target = $region69
    $region68: #{tpu_custom_call.1} parent=1 // pred_region
      %s1816 = ssub.s32 256, 256
      %1817 = vsyncadd [#allocation4], %s1816
      %s1818 = sshll.u32 [#allocation3], 4
      %s1819 = int_to_ptr.vmem [resolvable:$true] %s1818
      %1824 = dma.vmem_to_hbm [thread:$0]  %s1819, 256, %s16, [#allocation4], 128, 128, 8
    $region69: #{tpu_custom_call.1} parent=1 // pred_fallthru
      _
    // Predicated region
    $region70: #{tpu_custom_call.1} parent=1 // pred_check
      _
    $region71: #{tpu_custom_call.1} parent=1 // pred_check_branch
      %1826 = sbr.rel (0) target = $region73
    $region72: #{tpu_custom_call.1} parent=1 // pred_region
      %1827 = dma.done [#allocation4], 256
    $region73: #{tpu_custom_call.1} parent=1 // pred_fallthru
      _
    %1828 = vsyncpa [#allocation4], 1

</llo_original>
